<compile_context>
chip_gen: v7x
topology: tpu7x:2x2x1
jax: 0.10.0
libtpu: 0.0.40
codegen_flags: <defaults>
</compile_context>

<pallas_src>
import jax
import jax.numpy as jnp
from jax import lax
from jax.experimental import pallas as pl
from jax.experimental.pallas import tpu as pltpu

HIDDEN = 32
INPUT_DIM = 1
NUM_LAYERS = 2
OUTPUT_DIM = 1


def lstm_kernel(xpre_ref,  # (T+1, Bb, 8H) f32: [:, :, :4H] = x*W_ih0+b0 per step (row T = pad),
                           #                     [:, :, 4H:] = b1 (layer-1 fused bias)
                a_ref,     # (H, 8H) bf16: [whh0_s | wih1_s]   (h0(t) weights)
                b_ref,     # (H, 8H) bf16: [  0    | whh1_s]   (h1(t-1) weights)
                wfc_ref,   # (1, H)  f32 : final Linear weight row
                bfc_ref,   # (1, 1)  f32 : final Linear bias
                out_ref):  # (Bb, 1) f32
    H = HIDDEN
    T = xpre_ref.shape[0] - 1
    Bb = xpre_ref.shape[1]

    a_w = a_ref[...]                                   # resident bf16 weights
    b_w = b_ref[...]

    def cell(s, tg, lo, c_prev):
        # columns [lo, lo+4H) hold one LSTM cell's gates in PyTorch order i,f,g,o
        # s = 0.5*tanh(z/2)+0.5 == sigmoid(z) (0.5 pre-folded into i/f/o columns)
        i = s[:, lo + 0 * H: lo + 1 * H]
        f = s[:, lo + 1 * H: lo + 2 * H]
        g = tg[:, lo + 2 * H: lo + 3 * H]              # tanh gate (unscaled column)
        o = s[:, lo + 3 * H: lo + 4 * H]
        c_new = f * c_prev + i * g
        h_new = o * jnp.tanh(c_new)
        return h_new, c_new

    # ---- prologue: layer-0 cell at t=0 (zero initial hidden/cell state) ----
    g0 = xpre_ref[0][:, :4 * H]                        # hidden contribution is 0
    tg = jnp.tanh(g0)
    s = 0.5 * tg + 0.5
    h0, c0 = cell(s, tg, 0, jnp.zeros((Bb, H), jnp.float32))
    h1 = jnp.zeros((Bb, H), jnp.float32)
    c1 = jnp.zeros((Bb, H), jnp.float32)

    # ---- wavefront loop: iteration t computes layer1(t) and layer0(t+1) ----
    def step(t, carry):
        h0, c0, h1, c1 = carry
        gf = (jnp.dot(h0.astype(jnp.bfloat16), a_w,
                      preferred_element_type=jnp.float32)
              + jnp.dot(h1.astype(jnp.bfloat16), b_w,
                        preferred_element_type=jnp.float32)
              + xpre_ref[t + 1])                       # (Bb, 8H)
        tg = jnp.tanh(gf)                              # single EUP pass over the block
        s = 0.5 * tg + 0.5
        h1n, c1n = cell(s, tg, 4 * H, c1)              # layer 1, time t
        h0n, c0n = cell(s, tg, 0, c0)                  # layer 0, time t+1
        # (at t == T-1 the layer-0 half reads the zero pad row; result is unused)
        return h0n, c0n, h1n, c1n

    unroll = True if T <= 32 else 8
    _, _, h1, _ = lax.fori_loop(0, T, step, (h0, c0, h1, c1), unroll=unroll)

    # ---- final Linear (H -> 1): VPU multiply + lane reduction ----
    out_ref[...] = (jnp.sum(h1 * wfc_ref[...], axis=-1, keepdims=True)
                    + bfc_ref[...])


def _round_up(x, m):
    return ((x + m - 1) // m) * m


def lstm_forward(x, kernel_params):
    """x: (B, T, INPUT_DIM) float32 (batch_first, like PyTorch) -> (B, OUTPUT_DIM)."""
    B, T, D = x.shape
    assert D == INPUT_DIM
    H = HIDDEN

    # Batch tiling: up to 128 rows per grid step (parallel axis -> both TCs on v7x).
    if B <= 128:
        Bb = _round_up(B, 8)
        Bp = Bb
    else:
        Bb = 128
        Bp = _round_up(B, Bb)
    n_blocks = Bp // Bb

    (w0_vec, b0_vec, b1_vec, a_bf16, b_bf16, wfc_row, bfc2d) = kernel_params

    # time-major, batch padded
    x_tm = jnp.transpose(x, (1, 0, 2))                 # (T, B, 1)
    if Bp != B:
        x_tm = jnp.pad(x_tm, ((0, 0), (0, Bp - B), (0, 0)))

    # Precompute the layer-0 input projection for the whole sequence (hoisted,
    # non-recurrent) and pack the fused layer-1 bias into lanes 4H:8H.  Row T is
    # a zero pad so the last wavefront iteration stays uniform.
    xg0 = x_tm * w0_vec + b0_vec                       # (T, Bp, 4H)
    xg0 = jnp.concatenate(
        [xg0, jnp.zeros((1, Bp, 4 * H), jnp.float32)], axis=0)      # (T+1, Bp, 4H)
    b1_blk = jnp.broadcast_to(b1_vec, (T + 1, Bp, 4 * H))
    xpre = jnp.concatenate([xg0, b1_blk], axis=-1)     # (T+1, Bp, 8H)

    grid_spec = pltpu.PrefetchScalarGridSpec(
        num_scalar_prefetch=0,
        grid=(n_blocks,),                              # batch blocks are independent
        in_specs=[
            pl.BlockSpec((T + 1, Bb, 8 * H), lambda i: (0, i, 0)),
            pl.BlockSpec((H, 8 * H), lambda i: (0, 0)),
            pl.BlockSpec((H, 8 * H), lambda i: (0, 0)),
            pl.BlockSpec((1, H), lambda i: (0, 0)),
            pl.BlockSpec((1, 1), lambda i: (0, 0)),
        ],
        out_specs=pl.BlockSpec((Bb, OUTPUT_DIM), lambda i: (i, 0)),
    )

    out_pad = pl.pallas_call(
        lstm_kernel,
        out_shape=jax.ShapeDtypeStruct((Bp, OUTPUT_DIM), jnp.float32),
        grid_spec=grid_spec,
        compiler_params=pltpu.CompilerParams(
            dimension_semantics=("parallel",)),
    )(xpre, a_bf16, b_bf16, wfc_row, bfc2d)

    return out_pad[:B]


def init_params(key):
    """Deterministic init mirroring PyTorch default LSTM/Linear shapes."""
    H = HIDDEN
    k = 1.0 / jnp.sqrt(jnp.float32(H))
    keys = jax.random.split(key, 10)

    def u(kk, shape):
        return jax.random.uniform(kk, shape, jnp.float32, -k, k)

    # PyTorch-shaped params: weight_ih_l0 (4H, D), weight_hh_l0 (4H, H), ...
    wih0 = u(keys[0], (4 * H, INPUT_DIM))
    whh0 = u(keys[1], (4 * H, H))
    bih0 = u(keys[2], (4 * H,))
    bhh0 = u(keys[3], (4 * H,))
    wih1 = u(keys[4], (4 * H, H))
    whh1 = u(keys[5], (4 * H, H))
    bih1 = u(keys[6], (4 * H,))
    bhh1 = u(keys[7], (4 * H,))
    wfc = u(keys[8], (OUTPUT_DIM, H))
    bfc = u(keys[9], (OUTPUT_DIM,))
    torch_params = (wih0, whh0, bih0, bhh0, wih1, whh1, bih1, bhh1, wfc, bfc)

    # tanh-form gate folding: sigmoid(z) = 0.5*tanh(z/2) + 0.5, so pre-scale the
    # i/f/o weight & bias columns by 0.5; the g (tanh) columns stay unscaled.
    col_scale = jnp.concatenate([
        jnp.full((2 * H,), 0.5, jnp.float32),          # i, f
        jnp.ones((H,), jnp.float32),                   # g
        jnp.full((H,), 0.5, jnp.float32),              # o
    ])

    w0_vec = (wih0.T * col_scale)[0]                   # (4H,) layer-0 input row (D=1)
    b0_vec = (bih0 + bhh0) * col_scale                 # (4H,)
    b1_vec = (bih1 + bhh1) * col_scale                 # (4H,)
    whh0_s = whh0.T * col_scale                        # (H, 4H)
    wih1_s = wih1.T * col_scale                        # (H, 4H)
    whh1_s = whh1.T * col_scale                        # (H, 4H)

    # Wavefront-fused hidden weights (bf16 MXU operands, f32 accumulation):
    #   cols 0:4H -> layer-0 gates at time t+1, cols 4H:8H -> layer-1 gates at time t.
    a_bf16 = jnp.concatenate([whh0_s, wih1_s], axis=1).astype(jnp.bfloat16)
    b_bf16 = jnp.concatenate([jnp.zeros_like(whh1_s), whh1_s],
                             axis=1).astype(jnp.bfloat16)

    wfc_row = wfc                                      # (1, H)
    bfc2d = bfc[None, :]                               # (1, 1)

    kernel_params = (w0_vec, b0_vec, b1_vec, a_bf16, b_bf16, wfc_row, bfc2d)
    return torch_params, kernel_params


def lstm_ref(x, torch_params):
    """Pure-JAX f32 reference matching nn.LSTM (2 layers) + Linear on last step."""
    (wih0, whh0, bih0, bhh0, wih1, whh1, bih1, bhh1, wfc, bfc) = torch_params
    B, T, _ = x.shape
    H = HIDDEN

    def cell(inp, h, c, wih, whh, bih, bhh):
        gates = inp @ wih.T + bih + h @ whh.T + bhh
        i = jax.nn.sigmoid(gates[:, :H])
        f = jax.nn.sigmoid(gates[:, H:2 * H])
        g = jnp.tanh(gates[:, 2 * H:3 * H])
        o = jax.nn.sigmoid(gates[:, 3 * H:])
        c = f * c + i * g
        h = o * jnp.tanh(c)
        return h, c

    zeros = jnp.zeros((B, H), jnp.float32)

    def step(carry, x_t):
        h0, c0, h1, c1 = carry
        h0, c0 = cell(x_t, h0, c0, wih0, whh0, bih0, bhh0)
        h1, c1 = cell(h0, h1, c1, wih1, whh1, bih1, bhh1)
        return (h0, c0, h1, c1), None

    (h0, c0, h1, c1), _ = lax.scan(step, (zeros, zeros, zeros, zeros),
                                   jnp.transpose(x, (1, 0, 2)))
    return h1 @ wfc.T + bfc


if __name__ == "__main__":
    key = jax.random.PRNGKey(0)
    pkey, xkey = jax.random.split(key)

    B, T = 4, 8
    x = jax.random.normal(xkey, (B, T, INPUT_DIM), jnp.float32)

    torch_params, kernel_params = init_params(pkey)

    out = jax.block_until_ready(lstm_forward(x, kernel_params))
    ref = jax.block_until_ready(lstm_ref(x, torch_params))

    assert out.shape == (B, OUTPUT_DIM)
    # bf16 MXU operands -> slightly looser tolerance vs the f32 reference.
    assert jnp.allclose(out, ref, atol=3e-2, rtol=3e-2), (out, ref)

    print("KERNEL_OK")
</pallas_src>

<mosaic_0001>
module attributes {stable_mosaic.version = 11 : i64} {
  func.func @lstm_kernel(%arg0: i32, %arg1: memref<9x8x256xf32, #tpu.memory_space<vmem>>, %arg2: memref<32x256xbf16, #tpu.memory_space<vmem>>, %arg3: memref<32x256xbf16, #tpu.memory_space<vmem>>, %arg4: memref<1x32xf32, #tpu.memory_space<vmem>>, %arg5: memref<1x1xf32, #tpu.memory_space<vmem>>, %arg6: memref<8x1xf32, #tpu.memory_space<vmem>>) attributes {dimension_semantics = [#tpu.dimension_semantics<parallel>], iteration_bounds = array<i64: 1>, scalar_prefetch = 0 : i64, scratch_operands = 0 : i64, tpu.core_type = #tpu.core_type<tc>, window_params = [{transform_indices = @transform_0, window_bounds = array<i64: 9, 8, 256>}, {pipeline_mode = #tpu.pipeline_mode<synchronous>, transform_indices = @transform_1, window_bounds = array<i64: 32, 256>}, {pipeline_mode = #tpu.pipeline_mode<synchronous>, transform_indices = @transform_2, window_bounds = array<i64: 32, 256>}, {pipeline_mode = #tpu.pipeline_mode<synchronous>, transform_indices = @transform_3, window_bounds = array<i64: 1, 32>}, {pipeline_mode = #tpu.pipeline_mode<synchronous>, transform_indices = @transform_4, window_bounds = array<i64: 1, 1>}, {transform_indices = @transform_5, window_bounds = array<i64: 8, 1>}]} {
    %c0 = arith.constant 0 : index
    %c0_0 = arith.constant 0 : index
    %0 = vector.load %arg2[%c0, %c0_0] : memref<32x256xbf16, #tpu.memory_space<vmem>>, vector<32x256xbf16>
    %c0_1 = arith.constant 0 : index
    %c0_2 = arith.constant 0 : index
    %1 = vector.load %arg3[%c0_1, %c0_2] : memref<32x256xbf16, #tpu.memory_space<vmem>>, vector<32x256xbf16>
    %c0_3 = arith.constant 0 : index
    %c0_4 = arith.constant 0 : index
    %c0_5 = arith.constant 0 : index
    %2 = vector.load %arg1[%c0_3, %c0_4, %c0_5] : memref<9x8x256xf32, #tpu.memory_space<vmem>>, vector<1x8x256xf32>
    %3 = vector.shape_cast %2 : vector<1x8x256xf32> to vector<8x256xf32>
    %4 = vector.extract_strided_slice %3 {offsets = [0, 0], sizes = [8, 128], strides = [1, 1]} : vector<8x256xf32> to vector<8x128xf32>
    %5 = math.tanh %4 : vector<8x128xf32>
    %cst = arith.constant 5.000000e-01 : f32
    %6 = vector.broadcast %cst : f32 to vector<8x128xf32>
    %7 = arith.mulf %6, %5 : vector<8x128xf32>
    %cst_6 = arith.constant 5.000000e-01 : f32
    %8 = vector.broadcast %cst_6 : f32 to vector<8x128xf32>
    %9 = arith.addf %7, %8 : vector<8x128xf32>
    %cst_7 = arith.constant 0.000000e+00 : f32
    %10 = vector.broadcast %cst_7 : f32 to vector<8x32xf32>
    %11 = vector.extract_strided_slice %9 {offsets = [0, 0], sizes = [8, 32], strides = [1, 1]} : vector<8x128xf32> to vector<8x32xf32>
    %12 = vector.extract_strided_slice %9 {offsets = [0, 32], sizes = [8, 32], strides = [1, 1]} : vector<8x128xf32> to vector<8x32xf32>
    %13 = vector.extract_strided_slice %5 {offsets = [0, 64], sizes = [8, 32], strides = [1, 1]} : vector<8x128xf32> to vector<8x32xf32>
    %14 = vector.extract_strided_slice %9 {offsets = [0, 96], sizes = [8, 32], strides = [1, 1]} : vector<8x128xf32> to vector<8x32xf32>
    %15 = arith.mulf %12, %10 : vector<8x32xf32>
    %16 = arith.mulf %11, %13 : vector<8x32xf32>
    %17 = arith.addf %15, %16 : vector<8x32xf32>
    %18 = math.tanh %17 : vector<8x32xf32>
    %19 = arith.mulf %14, %18 : vector<8x32xf32>
    %cst_8 = arith.constant 0.000000e+00 : f32
    %20 = vector.broadcast %cst_8 : f32 to vector<8x32xf32>
    %cst_9 = arith.constant 0.000000e+00 : f32
    %21 = vector.broadcast %cst_9 : f32 to vector<8x32xf32>
    %c0_i32 = arith.constant 0 : i32
    %22 = arith.truncf %19 : vector<8x32xf32> to vector<8x32xbf16>
    %cst_10 = arith.constant dense<0.000000e+00> : vector<8x256xf32>
    %23 = tpu.matmul %22, %0, %cst_10 {dimension_numbers = #tpu.dot_dimension_numbers<[1], [0], [0], [1], [0, 0, 1, 1], [], []>} : vector<8x32xbf16>, vector<32x256xbf16>, vector<8x256xf32> -> vector<8x256xf32>
    %24 = arith.truncf %20 : vector<8x32xf32> to vector<8x32xbf16>
    %cst_11 = arith.constant dense<0.000000e+00> : vector<8x256xf32>
    %25 = tpu.matmul %24, %1, %cst_11 {dimension_numbers = #tpu.dot_dimension_numbers<[1], [0], [0], [1], [0, 0, 1, 1], [], []>} : vector<8x32xbf16>, vector<32x256xbf16>, vector<8x256xf32> -> vector<8x256xf32>
    %26 = arith.addf %23, %25 : vector<8x256xf32>
    %c1_i32 = arith.constant 1 : i32
    %27 = arith.addi %c0_i32, %c1_i32 : i32
    %28 = arith.index_cast %27 : i32 to index
    %c0_12 = arith.constant 0 : index
    %c0_13 = arith.constant 0 : index
    %29 = vector.load %arg1[%28, %c0_12, %c0_13] : memref<9x8x256xf32, #tpu.memory_space<vmem>>, vector<1x8x256xf32>
    %30 = vector.shape_cast %29 : vector<1x8x256xf32> to vector<8x256xf32>
    %31 = arith.addf %26, %30 : vector<8x256xf32>
    %32 = math.tanh %31 : vector<8x256xf32>
    %cst_14 = arith.constant 5.000000e-01 : f32
    %33 = vector.broadcast %cst_14 : f32 to vector<8x256xf32>
    %34 = arith.mulf %33, %32 : vector<8x256xf32>
    %cst_15 = arith.constant 5.000000e-01 : f32
    %35 = vector.broadcast %cst_15 : f32 to vector<8x256xf32>
    %36 = arith.addf %34, %35 : vector<8x256xf32>
    %37 = vector.extract_strided_slice %36 {offsets = [0, 128], sizes = [8, 32], strides = [1, 1]} : vector<8x256xf32> to vector<8x32xf32>
    %38 = vector.extract_strided_slice %36 {offsets = [0, 160], sizes = [8, 32], strides = [1, 1]} : vector<8x256xf32> to vector<8x32xf32>
    %39 = vector.extract_strided_slice %32 {offsets = [0, 192], sizes = [8, 32], strides = [1, 1]} : vector<8x256xf32> to vector<8x32xf32>
    %40 = vector.extract_strided_slice %36 {offsets = [0, 224], sizes = [8, 32], strides = [1, 1]} : vector<8x256xf32> to vector<8x32xf32>
    %41 = arith.mulf %38, %21 : vector<8x32xf32>
    %42 = arith.mulf %37, %39 : vector<8x32xf32>
    %43 = arith.addf %41, %42 : vector<8x32xf32>
    %44 = math.tanh %43 : vector<8x32xf32>
    %45 = arith.mulf %40, %44 : vector<8x32xf32>
    %46 = vector.extract_strided_slice %36 {offsets = [0, 0], sizes = [8, 32], strides = [1, 1]} : vector<8x256xf32> to vector<8x32xf32>
    %47 = vector.extract_strided_slice %36 {offsets = [0, 32], sizes = [8, 32], strides = [1, 1]} : vector<8x256xf32> to vector<8x32xf32>
    %48 = vector.extract_strided_slice %32 {offsets = [0, 64], sizes = [8, 32], strides = [1, 1]} : vector<8x256xf32> to vector<8x32xf32>
    %49 = vector.extract_strided_slice %36 {offsets = [0, 96], sizes = [8, 32], strides = [1, 1]} : vector<8x256xf32> to vector<8x32xf32>
    %50 = arith.mulf %47, %17 : vector<8x32xf32>
    %51 = arith.mulf %46, %48 : vector<8x32xf32>
    %52 = arith.addf %50, %51 : vector<8x32xf32>
    %53 = math.tanh %52 : vector<8x32xf32>
    %54 = arith.mulf %49, %53 : vector<8x32xf32>
    %c1_i32_16 = arith.constant 1 : i32
    %55 = arith.truncf %54 : vector<8x32xf32> to vector<8x32xbf16>
    %cst_17 = arith.constant dense<0.000000e+00> : vector<8x256xf32>
    %56 = tpu.matmul %55, %0, %cst_17 {dimension_numbers = #tpu.dot_dimension_numbers<[1], [0], [0], [1], [0, 0, 1, 1], [], []>} : vector<8x32xbf16>, vector<32x256xbf16>, vector<8x256xf32> -> vector<8x256xf32>
    %57 = arith.truncf %45 : vector<8x32xf32> to vector<8x32xbf16>
    %cst_18 = arith.constant dense<0.000000e+00> : vector<8x256xf32>
    %58 = tpu.matmul %57, %1, %cst_18 {dimension_numbers = #tpu.dot_dimension_numbers<[1], [0], [0], [1], [0, 0, 1, 1], [], []>} : vector<8x32xbf16>, vector<32x256xbf16>, vector<8x256xf32> -> vector<8x256xf32>
    %59 = arith.addf %56, %58 : vector<8x256xf32>
    %c1_i32_19 = arith.constant 1 : i32
    %60 = arith.addi %c1_i32_16, %c1_i32_19 : i32
    %61 = arith.index_cast %60 : i32 to index
    %c0_20 = arith.constant 0 : index
    %c0_21 = arith.constant 0 : index
    %62 = vector.load %arg1[%61, %c0_20, %c0_21] : memref<9x8x256xf32, #tpu.memory_space<vmem>>, vector<1x8x256xf32>
    %63 = vector.shape_cast %62 : vector<1x8x256xf32> to vector<8x256xf32>
    %64 = arith.addf %59, %63 : vector<8x256xf32>
    %65 = math.tanh %64 : vector<8x256xf32>
    %cst_22 = arith.constant 5.000000e-01 : f32
    %66 = vector.broadcast %cst_22 : f32 to vector<8x256xf32>
    %67 = arith.mulf %66, %65 : vector<8x256xf32>
    %cst_23 = arith.constant 5.000000e-01 : f32
    %68 = vector.broadcast %cst_23 : f32 to vector<8x256xf32>
    %69 = arith.addf %67, %68 : vector<8x256xf32>
    %70 = vector.extract_strided_slice %69 {offsets = [0, 128], sizes = [8, 32], strides = [1, 1]} : vector<8x256xf32> to vector<8x32xf32>
    %71 = vector.extract_strided_slice %69 {offsets = [0, 160], sizes = [8, 32], strides = [1, 1]} : vector<8x256xf32> to vector<8x32xf32>
    %72 = vector.extract_strided_slice %65 {offsets = [0, 192], sizes = [8, 32], strides = [1, 1]} : vector<8x256xf32> to vector<8x32xf32>
    %73 = vector.extract_strided_slice %69 {offsets = [0, 224], sizes = [8, 32], strides = [1, 1]} : vector<8x256xf32> to vector<8x32xf32>
    %74 = arith.mulf %71, %43 : vector<8x32xf32>
    %75 = arith.mulf %70, %72 : vector<8x32xf32>
    %76 = arith.addf %74, %75 : vector<8x32xf32>
    %77 = math.tanh %76 : vector<8x32xf32>
    %78 = arith.mulf %73, %77 : vector<8x32xf32>
    %79 = vector.extract_strided_slice %69 {offsets = [0, 0], sizes = [8, 32], strides = [1, 1]} : vector<8x256xf32> to vector<8x32xf32>
    %80 = vector.extract_strided_slice %69 {offsets = [0, 32], sizes = [8, 32], strides = [1, 1]} : vector<8x256xf32> to vector<8x32xf32>
    %81 = vector.extract_strided_slice %65 {offsets = [0, 64], sizes = [8, 32], strides = [1, 1]} : vector<8x256xf32> to vector<8x32xf32>
    %82 = vector.extract_strided_slice %69 {offsets = [0, 96], sizes = [8, 32], strides = [1, 1]} : vector<8x256xf32> to vector<8x32xf32>
    %83 = arith.mulf %80, %52 : vector<8x32xf32>
    %84 = arith.mulf %79, %81 : vector<8x32xf32>
    %85 = arith.addf %83, %84 : vector<8x32xf32>
    %86 = math.tanh %85 : vector<8x32xf32>
    %87 = arith.mulf %82, %86 : vector<8x32xf32>
    %c2_i32 = arith.constant 2 : i32
    %88 = arith.truncf %87 : vector<8x32xf32> to vector<8x32xbf16>
    %cst_24 = arith.constant dense<0.000000e+00> : vector<8x256xf32>
    %89 = tpu.matmul %88, %0, %cst_24 {dimension_numbers = #tpu.dot_dimension_numbers<[1], [0], [0], [1], [0, 0, 1, 1], [], []>} : vector<8x32xbf16>, vector<32x256xbf16>, vector<8x256xf32> -> vector<8x256xf32>
    %90 = arith.truncf %78 : vector<8x32xf32> to vector<8x32xbf16>
    %cst_25 = arith.constant dense<0.000000e+00> : vector<8x256xf32>
    %91 = tpu.matmul %90, %1, %cst_25 {dimension_numbers = #tpu.dot_dimension_numbers<[1], [0], [0], [1], [0, 0, 1, 1], [], []>} : vector<8x32xbf16>, vector<32x256xbf16>, vector<8x256xf32> -> vector<8x256xf32>
    %92 = arith.addf %89, %91 : vector<8x256xf32>
    %c1_i32_26 = arith.constant 1 : i32
    %93 = arith.addi %c2_i32, %c1_i32_26 : i32
    %94 = arith.index_cast %93 : i32 to index
    %c0_27 = arith.constant 0 : index
    %c0_28 = arith.constant 0 : index
    %95 = vector.load %arg1[%94, %c0_27, %c0_28] : memref<9x8x256xf32, #tpu.memory_space<vmem>>, vector<1x8x256xf32>
    %96 = vector.shape_cast %95 : vector<1x8x256xf32> to vector<8x256xf32>
    %97 = arith.addf %92, %96 : vector<8x256xf32>
    %98 = math.tanh %97 : vector<8x256xf32>
    %cst_29 = arith.constant 5.000000e-01 : f32
    %99 = vector.broadcast %cst_29 : f32 to vector<8x256xf32>
    %100 = arith.mulf %99, %98 : vector<8x256xf32>
    %cst_30 = arith.constant 5.000000e-01 : f32
    %101 = vector.broadcast %cst_30 : f32 to vector<8x256xf32>
    %102 = arith.addf %100, %101 : vector<8x256xf32>
    %103 = vector.extract_strided_slice %102 {offsets = [0, 128], sizes = [8, 32], strides = [1, 1]} : vector<8x256xf32> to vector<8x32xf32>
    %104 = vector.extract_strided_slice %102 {offsets = [0, 160], sizes = [8, 32], strides = [1, 1]} : vector<8x256xf32> to vector<8x32xf32>
    %105 = vector.extract_strided_slice %98 {offsets = [0, 192], sizes = [8, 32], strides = [1, 1]} : vector<8x256xf32> to vector<8x32xf32>
    %106 = vector.extract_strided_slice %102 {offsets = [0, 224], sizes = [8, 32], strides = [1, 1]} : vector<8x256xf32> to vector<8x32xf32>
    %107 = arith.mulf %104, %76 : vector<8x32xf32>
    %108 = arith.mulf %103, %105 : vector<8x32xf32>
    %109 = arith.addf %107, %108 : vector<8x32xf32>
    %110 = math.tanh %109 : vector<8x32xf32>
    %111 = arith.mulf %106, %110 : vector<8x32xf32>
    %112 = vector.extract_strided_slice %102 {offsets = [0, 0], sizes = [8, 32], strides = [1, 1]} : vector<8x256xf32> to vector<8x32xf32>
    %113 = vector.extract_strided_slice %102 {offsets = [0, 32], sizes = [8, 32], strides = [1, 1]} : vector<8x256xf32> to vector<8x32xf32>
    %114 = vector.extract_strided_slice %98 {offsets = [0, 64], sizes = [8, 32], strides = [1, 1]} : vector<8x256xf32> to vector<8x32xf32>
    %115 = vector.extract_strided_slice %102 {offsets = [0, 96], sizes = [8, 32], strides = [1, 1]} : vector<8x256xf32> to vector<8x32xf32>
    %116 = arith.mulf %113, %85 : vector<8x32xf32>
    %117 = arith.mulf %112, %114 : vector<8x32xf32>
    %118 = arith.addf %116, %117 : vector<8x32xf32>
    %119 = math.tanh %118 : vector<8x32xf32>
    %120 = arith.mulf %115, %119 : vector<8x32xf32>
    %c3_i32 = arith.constant 3 : i32
    %121 = arith.truncf %120 : vector<8x32xf32> to vector<8x32xbf16>
    %cst_31 = arith.constant dense<0.000000e+00> : vector<8x256xf32>
    %122 = tpu.matmul %121, %0, %cst_31 {dimension_numbers = #tpu.dot_dimension_numbers<[1], [0], [0], [1], [0, 0, 1, 1], [], []>} : vector<8x32xbf16>, vector<32x256xbf16>, vector<8x256xf32> -> vector<8x256xf32>
    %123 = arith.truncf %111 : vector<8x32xf32> to vector<8x32xbf16>
    %cst_32 = arith.constant dense<0.000000e+00> : vector<8x256xf32>
    %124 = tpu.matmul %123, %1, %cst_32 {dimension_numbers = #tpu.dot_dimension_numbers<[1], [0], [0], [1], [0, 0, 1, 1], [], []>} : vector<8x32xbf16>, vector<32x256xbf16>, vector<8x256xf32> -> vector<8x256xf32>
    %125 = arith.addf %122, %124 : vector<8x256xf32>
    %c1_i32_33 = arith.constant 1 : i32
    %126 = arith.addi %c3_i32, %c1_i32_33 : i32
    %127 = arith.index_cast %126 : i32 to index
    %c0_34 = arith.constant 0 : index
    %c0_35 = arith.constant 0 : index
    %128 = vector.load %arg1[%127, %c0_34, %c0_35] : memref<9x8x256xf32, #tpu.memory_space<vmem>>, vector<1x8x256xf32>
    %129 = vector.shape_cast %128 : vector<1x8x256xf32> to vector<8x256xf32>
    %130 = arith.addf %125, %129 : vector<8x256xf32>
    %131 = math.tanh %130 : vector<8x256xf32>
    %cst_36 = arith.constant 5.000000e-01 : f32
    %132 = vector.broadcast %cst_36 : f32 to vector<8x256xf32>
    %133 = arith.mulf %132, %131 : vector<8x256xf32>
    %cst_37 = arith.constant 5.000000e-01 : f32
    %134 = vector.broadcast %cst_37 : f32 to vector<8x256xf32>
    %135 = arith.addf %133, %134 : vector<8x256xf32>
    %136 = vector.extract_strided_slice %135 {offsets = [0, 128], sizes = [8, 32], strides = [1, 1]} : vector<8x256xf32> to vector<8x32xf32>
    %137 = vector.extract_strided_slice %135 {offsets = [0, 160], sizes = [8, 32], strides = [1, 1]} : vector<8x256xf32> to vector<8x32xf32>
    %138 = vector.extract_strided_slice %131 {offsets = [0, 192], sizes = [8, 32], strides = [1, 1]} : vector<8x256xf32> to vector<8x32xf32>
    %139 = vector.extract_strided_slice %135 {offsets = [0, 224], sizes = [8, 32], strides = [1, 1]} : vector<8x256xf32> to vector<8x32xf32>
    %140 = arith.mulf %137, %109 : vector<8x32xf32>
    %141 = arith.mulf %136, %138 : vector<8x32xf32>
    %142 = arith.addf %140, %141 : vector<8x32xf32>
    %143 = math.tanh %142 : vector<8x32xf32>
    %144 = arith.mulf %139, %143 : vector<8x32xf32>
    %145 = vector.extract_strided_slice %135 {offsets = [0, 0], sizes = [8, 32], strides = [1, 1]} : vector<8x256xf32> to vector<8x32xf32>
    %146 = vector.extract_strided_slice %135 {offsets = [0, 32], sizes = [8, 32], strides = [1, 1]} : vector<8x256xf32> to vector<8x32xf32>
    %147 = vector.extract_strided_slice %131 {offsets = [0, 64], sizes = [8, 32], strides = [1, 1]} : vector<8x256xf32> to vector<8x32xf32>
    %148 = vector.extract_strided_slice %135 {offsets = [0, 96], sizes = [8, 32], strides = [1, 1]} : vector<8x256xf32> to vector<8x32xf32>
    %149 = arith.mulf %146, %118 : vector<8x32xf32>
    %150 = arith.mulf %145, %147 : vector<8x32xf32>
    %151 = arith.addf %149, %150 : vector<8x32xf32>
    %152 = math.tanh %151 : vector<8x32xf32>
    %153 = arith.mulf %148, %152 : vector<8x32xf32>
    %c4_i32 = arith.constant 4 : i32
    %154 = arith.truncf %153 : vector<8x32xf32> to vector<8x32xbf16>
    %cst_38 = arith.constant dense<0.000000e+00> : vector<8x256xf32>
    %155 = tpu.matmul %154, %0, %cst_38 {dimension_numbers = #tpu.dot_dimension_numbers<[1], [0], [0], [1], [0, 0, 1, 1], [], []>} : vector<8x32xbf16>, vector<32x256xbf16>, vector<8x256xf32> -> vector<8x256xf32>
    %156 = arith.truncf %144 : vector<8x32xf32> to vector<8x32xbf16>
    %cst_39 = arith.constant dense<0.000000e+00> : vector<8x256xf32>
    %157 = tpu.matmul %156, %1, %cst_39 {dimension_numbers = #tpu.dot_dimension_numbers<[1], [0], [0], [1], [0, 0, 1, 1], [], []>} : vector<8x32xbf16>, vector<32x256xbf16>, vector<8x256xf32> -> vector<8x256xf32>
    %158 = arith.addf %155, %157 : vector<8x256xf32>
    %c1_i32_40 = arith.constant 1 : i32
    %159 = arith.addi %c4_i32, %c1_i32_40 : i32
    %160 = arith.index_cast %159 : i32 to index
    %c0_41 = arith.constant 0 : index
    %c0_42 = arith.constant 0 : index
    %161 = vector.load %arg1[%160, %c0_41, %c0_42] : memref<9x8x256xf32, #tpu.memory_space<vmem>>, vector<1x8x256xf32>
    %162 = vector.shape_cast %161 : vector<1x8x256xf32> to vector<8x256xf32>
    %163 = arith.addf %158, %162 : vector<8x256xf32>
    %164 = math.tanh %163 : vector<8x256xf32>
    %cst_43 = arith.constant 5.000000e-01 : f32
    %165 = vector.broadcast %cst_43 : f32 to vector<8x256xf32>
    %166 = arith.mulf %165, %164 : vector<8x256xf32>
    %cst_44 = arith.constant 5.000000e-01 : f32
    %167 = vector.broadcast %cst_44 : f32 to vector<8x256xf32>
    %168 = arith.addf %166, %167 : vector<8x256xf32>
    %169 = vector.extract_strided_slice %168 {offsets = [0, 128], sizes = [8, 32], strides = [1, 1]} : vector<8x256xf32> to vector<8x32xf32>
    %170 = vector.extract_strided_slice %168 {offsets = [0, 160], sizes = [8, 32], strides = [1, 1]} : vector<8x256xf32> to vector<8x32xf32>
    %171 = vector.extract_strided_slice %164 {offsets = [0, 192], sizes = [8, 32], strides = [1, 1]} : vector<8x256xf32> to vector<8x32xf32>
    %172 = vector.extract_strided_slice %168 {offsets = [0, 224], sizes = [8, 32], strides = [1, 1]} : vector<8x256xf32> to vector<8x32xf32>
    %173 = arith.mulf %170, %142 : vector<8x32xf32>
    %174 = arith.mulf %169, %171 : vector<8x32xf32>
    %175 = arith.addf %173, %174 : vector<8x32xf32>
    %176 = math.tanh %175 : vector<8x32xf32>
    %177 = arith.mulf %172, %176 : vector<8x32xf32>
    %178 = vector.extract_strided_slice %168 {offsets = [0, 0], sizes = [8, 32], strides = [1, 1]} : vector<8x256xf32> to vector<8x32xf32>
    %179 = vector.extract_strided_slice %168 {offsets = [0, 32], sizes = [8, 32], strides = [1, 1]} : vector<8x256xf32> to vector<8x32xf32>
    %180 = vector.extract_strided_slice %164 {offsets = [0, 64], sizes = [8, 32], strides = [1, 1]} : vector<8x256xf32> to vector<8x32xf32>
    %181 = vector.extract_strided_slice %168 {offsets = [0, 96], sizes = [8, 32], strides = [1, 1]} : vector<8x256xf32> to vector<8x32xf32>
    %182 = arith.mulf %179, %151 : vector<8x32xf32>
    %183 = arith.mulf %178, %180 : vector<8x32xf32>
    %184 = arith.addf %182, %183 : vector<8x32xf32>
    %185 = math.tanh %184 : vector<8x32xf32>
    %186 = arith.mulf %181, %185 : vector<8x32xf32>
    %c5_i32 = arith.constant 5 : i32
    %187 = arith.truncf %186 : vector<8x32xf32> to vector<8x32xbf16>
    %cst_45 = arith.constant dense<0.000000e+00> : vector<8x256xf32>
    %188 = tpu.matmul %187, %0, %cst_45 {dimension_numbers = #tpu.dot_dimension_numbers<[1], [0], [0], [1], [0, 0, 1, 1], [], []>} : vector<8x32xbf16>, vector<32x256xbf16>, vector<8x256xf32> -> vector<8x256xf32>
    %189 = arith.truncf %177 : vector<8x32xf32> to vector<8x32xbf16>
    %cst_46 = arith.constant dense<0.000000e+00> : vector<8x256xf32>
    %190 = tpu.matmul %189, %1, %cst_46 {dimension_numbers = #tpu.dot_dimension_numbers<[1], [0], [0], [1], [0, 0, 1, 1], [], []>} : vector<8x32xbf16>, vector<32x256xbf16>, vector<8x256xf32> -> vector<8x256xf32>
    %191 = arith.addf %188, %190 : vector<8x256xf32>
    %c1_i32_47 = arith.constant 1 : i32
    %192 = arith.addi %c5_i32, %c1_i32_47 : i32
    %193 = arith.index_cast %192 : i32 to index
    %c0_48 = arith.constant 0 : index
    %c0_49 = arith.constant 0 : index
    %194 = vector.load %arg1[%193, %c0_48, %c0_49] : memref<9x8x256xf32, #tpu.memory_space<vmem>>, vector<1x8x256xf32>
    %195 = vector.shape_cast %194 : vector<1x8x256xf32> to vector<8x256xf32>
    %196 = arith.addf %191, %195 : vector<8x256xf32>
    %197 = math.tanh %196 : vector<8x256xf32>
    %cst_50 = arith.constant 5.000000e-01 : f32
    %198 = vector.broadcast %cst_50 : f32 to vector<8x256xf32>
    %199 = arith.mulf %198, %197 : vector<8x256xf32>
    %cst_51 = arith.constant 5.000000e-01 : f32
    %200 = vector.broadcast %cst_51 : f32 to vector<8x256xf32>
    %201 = arith.addf %199, %200 : vector<8x256xf32>
    %202 = vector.extract_strided_slice %201 {offsets = [0, 128], sizes = [8, 32], strides = [1, 1]} : vector<8x256xf32> to vector<8x32xf32>
    %203 = vector.extract_strided_slice %201 {offsets = [0, 160], sizes = [8, 32], strides = [1, 1]} : vector<8x256xf32> to vector<8x32xf32>
    %204 = vector.extract_strided_slice %197 {offsets = [0, 192], sizes = [8, 32], strides = [1, 1]} : vector<8x256xf32> to vector<8x32xf32>
    %205 = vector.extract_strided_slice %201 {offsets = [0, 224], sizes = [8, 32], strides = [1, 1]} : vector<8x256xf32> to vector<8x32xf32>
    %206 = arith.mulf %203, %175 : vector<8x32xf32>
    %207 = arith.mulf %202, %204 : vector<8x32xf32>
    %208 = arith.addf %206, %207 : vector<8x32xf32>
    %209 = math.tanh %208 : vector<8x32xf32>
    %210 = arith.mulf %205, %209 : vector<8x32xf32>
    %211 = vector.extract_strided_slice %201 {offsets = [0, 0], sizes = [8, 32], strides = [1, 1]} : vector<8x256xf32> to vector<8x32xf32>
    %212 = vector.extract_strided_slice %201 {offsets = [0, 32], sizes = [8, 32], strides = [1, 1]} : vector<8x256xf32> to vector<8x32xf32>
    %213 = vector.extract_strided_slice %197 {offsets = [0, 64], sizes = [8, 32], strides = [1, 1]} : vector<8x256xf32> to vector<8x32xf32>
    %214 = vector.extract_strided_slice %201 {offsets = [0, 96], sizes = [8, 32], strides = [1, 1]} : vector<8x256xf32> to vector<8x32xf32>
    %215 = arith.mulf %212, %184 : vector<8x32xf32>
    %216 = arith.mulf %211, %213 : vector<8x32xf32>
    %217 = arith.addf %215, %216 : vector<8x32xf32>
    %218 = math.tanh %217 : vector<8x32xf32>
    %219 = arith.mulf %214, %218 : vector<8x32xf32>
    %c6_i32 = arith.constant 6 : i32
    %220 = arith.truncf %219 : vector<8x32xf32> to vector<8x32xbf16>
    %cst_52 = arith.constant dense<0.000000e+00> : vector<8x256xf32>
    %221 = tpu.matmul %220, %0, %cst_52 {dimension_numbers = #tpu.dot_dimension_numbers<[1], [0], [0], [1], [0, 0, 1, 1], [], []>} : vector<8x32xbf16>, vector<32x256xbf16>, vector<8x256xf32> -> vector<8x256xf32>
    %222 = arith.truncf %210 : vector<8x32xf32> to vector<8x32xbf16>
    %cst_53 = arith.constant dense<0.000000e+00> : vector<8x256xf32>
    %223 = tpu.matmul %222, %1, %cst_53 {dimension_numbers = #tpu.dot_dimension_numbers<[1], [0], [0], [1], [0, 0, 1, 1], [], []>} : vector<8x32xbf16>, vector<32x256xbf16>, vector<8x256xf32> -> vector<8x256xf32>
    %224 = arith.addf %221, %223 : vector<8x256xf32>
    %c1_i32_54 = arith.constant 1 : i32
    %225 = arith.addi %c6_i32, %c1_i32_54 : i32
    %226 = arith.index_cast %225 : i32 to index
    %c0_55 = arith.constant 0 : index
    %c0_56 = arith.constant 0 : index
    %227 = vector.load %arg1[%226, %c0_55, %c0_56] : memref<9x8x256xf32, #tpu.memory_space<vmem>>, vector<1x8x256xf32>
    %228 = vector.shape_cast %227 : vector<1x8x256xf32> to vector<8x256xf32>
    %229 = arith.addf %224, %228 : vector<8x256xf32>
    %230 = math.tanh %229 : vector<8x256xf32>
    %cst_57 = arith.constant 5.000000e-01 : f32
    %231 = vector.broadcast %cst_57 : f32 to vector<8x256xf32>
    %232 = arith.mulf %231, %230 : vector<8x256xf32>
    %cst_58 = arith.constant 5.000000e-01 : f32
    %233 = vector.broadcast %cst_58 : f32 to vector<8x256xf32>
    %234 = arith.addf %232, %233 : vector<8x256xf32>
    %235 = vector.extract_strided_slice %234 {offsets = [0, 128], sizes = [8, 32], strides = [1, 1]} : vector<8x256xf32> to vector<8x32xf32>
    %236 = vector.extract_strided_slice %234 {offsets = [0, 160], sizes = [8, 32], strides = [1, 1]} : vector<8x256xf32> to vector<8x32xf32>
    %237 = vector.extract_strided_slice %230 {offsets = [0, 192], sizes = [8, 32], strides = [1, 1]} : vector<8x256xf32> to vector<8x32xf32>
    %238 = vector.extract_strided_slice %234 {offsets = [0, 224], sizes = [8, 32], strides = [1, 1]} : vector<8x256xf32> to vector<8x32xf32>
    %239 = arith.mulf %236, %208 : vector<8x32xf32>
    %240 = arith.mulf %235, %237 : vector<8x32xf32>
    %241 = arith.addf %239, %240 : vector<8x32xf32>
    %242 = math.tanh %241 : vector<8x32xf32>
    %243 = arith.mulf %238, %242 : vector<8x32xf32>
    %244 = vector.extract_strided_slice %234 {offsets = [0, 0], sizes = [8, 32], strides = [1, 1]} : vector<8x256xf32> to vector<8x32xf32>
    %245 = vector.extract_strided_slice %234 {offsets = [0, 32], sizes = [8, 32], strides = [1, 1]} : vector<8x256xf32> to vector<8x32xf32>
    %246 = vector.extract_strided_slice %230 {offsets = [0, 64], sizes = [8, 32], strides = [1, 1]} : vector<8x256xf32> to vector<8x32xf32>
    %247 = vector.extract_strided_slice %234 {offsets = [0, 96], sizes = [8, 32], strides = [1, 1]} : vector<8x256xf32> to vector<8x32xf32>
    %248 = arith.mulf %245, %217 : vector<8x32xf32>
    %249 = arith.mulf %244, %246 : vector<8x32xf32>
    %250 = arith.addf %248, %249 : vector<8x32xf32>
    %251 = math.tanh %250 : vector<8x32xf32>
    %252 = arith.mulf %247, %251 : vector<8x32xf32>
    %c7_i32 = arith.constant 7 : i32
    %253 = arith.truncf %252 : vector<8x32xf32> to vector<8x32xbf16>
    %cst_59 = arith.constant dense<0.000000e+00> : vector<8x256xf32>
    %254 = tpu.matmul %253, %0, %cst_59 {dimension_numbers = #tpu.dot_dimension_numbers<[1], [0], [0], [1], [0, 0, 1, 1], [], []>} : vector<8x32xbf16>, vector<32x256xbf16>, vector<8x256xf32> -> vector<8x256xf32>
    %255 = arith.truncf %243 : vector<8x32xf32> to vector<8x32xbf16>
    %cst_60 = arith.constant dense<0.000000e+00> : vector<8x256xf32>
    %256 = tpu.matmul %255, %1, %cst_60 {dimension_numbers = #tpu.dot_dimension_numbers<[1], [0], [0], [1], [0, 0, 1, 1], [], []>} : vector<8x32xbf16>, vector<32x256xbf16>, vector<8x256xf32> -> vector<8x256xf32>
    %257 = arith.addf %254, %256 : vector<8x256xf32>
    %c1_i32_61 = arith.constant 1 : i32
    %258 = arith.addi %c7_i32, %c1_i32_61 : i32
    %259 = arith.index_cast %258 : i32 to index
    %c0_62 = arith.constant 0 : index
    %c0_63 = arith.constant 0 : index
    %260 = vector.load %arg1[%259, %c0_62, %c0_63] : memref<9x8x256xf32, #tpu.memory_space<vmem>>, vector<1x8x256xf32>
    %261 = vector.shape_cast %260 : vector<1x8x256xf32> to vector<8x256xf32>
    %262 = arith.addf %257, %261 : vector<8x256xf32>
    %263 = math.tanh %262 : vector<8x256xf32>
    %cst_64 = arith.constant 5.000000e-01 : f32
    %264 = vector.broadcast %cst_64 : f32 to vector<8x256xf32>
    %265 = arith.mulf %264, %263 : vector<8x256xf32>
    %cst_65 = arith.constant 5.000000e-01 : f32
    %266 = vector.broadcast %cst_65 : f32 to vector<8x256xf32>
    %267 = arith.addf %265, %266 : vector<8x256xf32>
    %268 = vector.extract_strided_slice %267 {offsets = [0, 128], sizes = [8, 32], strides = [1, 1]} : vector<8x256xf32> to vector<8x32xf32>
    %269 = vector.extract_strided_slice %267 {offsets = [0, 160], sizes = [8, 32], strides = [1, 1]} : vector<8x256xf32> to vector<8x32xf32>
    %270 = vector.extract_strided_slice %263 {offsets = [0, 192], sizes = [8, 32], strides = [1, 1]} : vector<8x256xf32> to vector<8x32xf32>
    %271 = vector.extract_strided_slice %267 {offsets = [0, 224], sizes = [8, 32], strides = [1, 1]} : vector<8x256xf32> to vector<8x32xf32>
    %272 = arith.mulf %269, %241 : vector<8x32xf32>
    %273 = arith.mulf %268, %270 : vector<8x32xf32>
    %274 = arith.addf %272, %273 : vector<8x32xf32>
    %275 = math.tanh %274 : vector<8x32xf32>
    %276 = arith.mulf %271, %275 : vector<8x32xf32>
    %277 = vector.extract_strided_slice %267 {offsets = [0, 0], sizes = [8, 32], strides = [1, 1]} : vector<8x256xf32> to vector<8x32xf32>
    %278 = vector.extract_strided_slice %267 {offsets = [0, 32], sizes = [8, 32], strides = [1, 1]} : vector<8x256xf32> to vector<8x32xf32>
    %279 = vector.extract_strided_slice %263 {offsets = [0, 64], sizes = [8, 32], strides = [1, 1]} : vector<8x256xf32> to vector<8x32xf32>
    %280 = vector.extract_strided_slice %267 {offsets = [0, 96], sizes = [8, 32], strides = [1, 1]} : vector<8x256xf32> to vector<8x32xf32>
    %281 = arith.mulf %278, %250 : vector<8x32xf32>
    %282 = arith.mulf %277, %279 : vector<8x32xf32>
    %283 = arith.addf %281, %282 : vector<8x32xf32>
    %284 = math.tanh %283 : vector<8x32xf32>
    %285 = arith.mulf %280, %284 : vector<8x32xf32>
    %c8_i32 = arith.constant 8 : i32
    %c0_66 = arith.constant 0 : index
    %c0_67 = arith.constant 0 : index
    %286 = vector.load %arg4[%c0_66, %c0_67] : memref<1x32xf32, #tpu.memory_space<vmem>>, vector<1x32xf32>
    %287 = vector.broadcast %286 : vector<1x32xf32> to vector<8x32xf32>
    %288 = arith.mulf %276, %287 : vector<8x32xf32>
    %cst_68 = arith.constant dense<0.000000e+00> : vector<8xf32>
    %289 = vector.multi_reduction <add>, %288, %cst_68 [1] : vector<8x32xf32> to vector<8xf32>
    %290 = vector.shape_cast %289 : vector<8xf32> to vector<8x1xf32>
    %c0_69 = arith.constant 0 : index
    %c0_70 = arith.constant 0 : index
    %291 = vector.load %arg5[%c0_69, %c0_70] : memref<1x1xf32, #tpu.memory_space<vmem>>, vector<1x1xf32>
    %292 = vector.broadcast %291 : vector<1x1xf32> to vector<8x1xf32>
    %293 = arith.addf %290, %292 : vector<8x1xf32>
    %c0_71 = arith.constant 0 : index
    %c0_72 = arith.constant 0 : index
    %294 = vector.load %arg6[%c0_71, %c0_72] : memref<8x1xf32, #tpu.memory_space<vmem>>, vector<8x1xf32>
    tpu.vector_store %arg6[%c0_71, %c0_72], %293 {strides = array<i32>} : memref<8x1xf32, #tpu.memory_space<vmem>>, vector<8x1xf32>,
    return
  }
  func.func @transform_0(%arg0: i32) -> (i32, i32, i32) {
    %c0_i32 = arith.constant 0 : i32
    %c0_i32_0 = arith.constant 0 : i32
    %c0_i32_1 = arith.constant 0 : i32
    return %c0_i32, %arg0, %c0_i32_0 : i32, i32, i32
  }
  func.func @transform_1(%arg0: i32) -> (i32, i32) {
    %c0_i32 = arith.constant 0 : i32
    %c0_i32_0 = arith.constant 0 : i32
    %c0_i32_1 = arith.constant 0 : i32
    return %c0_i32, %c0_i32_0 : i32, i32
  }
  func.func @transform_2(%arg0: i32) -> (i32, i32) {
    %c0_i32 = arith.constant 0 : i32
    %c0_i32_0 = arith.constant 0 : i32
    %c0_i32_1 = arith.constant 0 : i32
    return %c0_i32, %c0_i32_0 : i32, i32
  }
  func.func @transform_3(%arg0: i32) -> (i32, i32) {
    %c0_i32 = arith.constant 0 : i32
    %c0_i32_0 = arith.constant 0 : i32
    %c0_i32_1 = arith.constant 0 : i32
    return %c0_i32, %c0_i32_0 : i32, i32
  }
  func.func @transform_4(%arg0: i32) -> (i32, i32) {
    %c0_i32 = arith.constant 0 : i32
    %c0_i32_0 = arith.constant 0 : i32
    %c0_i32_1 = arith.constant 0 : i32
    return %c0_i32, %c0_i32_0 : i32, i32
  }
  func.func @transform_5(%arg0: i32) -> (i32, i32) {
    %c0_i32 = arith.constant 0 : i32
    %c0_i32_0 = arith.constant 0 : i32
    return %arg0, %c0_i32 : i32, i32
  }
}

</mosaic_0001>

<llo_original>
// kernel: tpu_custom_call.1
$region0: #{tpu_custom_call.1}
  #allocation0 [shape = 'u32[]', space=smem, size = 0x4, offset = 0x4, fixed_abs, tag = 'smem constant byte address 0x4 - core index']
  #allocation1 [shape = 'u32[144,128]{1,0:T(1,128)}', space=vmem, size = 0x12000, scoped, tag = 'internal scratch']
  #allocation2 [shape = 'f32[1,1]{1,0:T(1,128)S(1)}', space=vmem, size = 0x200, scoped, tag = 'scoped memory for tpu_custom_call.1']
  %s0 = inlined_call_operand.hbm [shape: f32[9,8,256], index: 0, kind: input, shape index: {}]
  %s1 = inlined_call_operand.hbm [shape: bf16[32,256], index: 1, kind: input, shape index: {}]
  %s2 = inlined_call_operand.hbm [shape: bf16[32,256], index: 2, kind: input, shape index: {}]
  %s3 = inlined_call_operand.vmem [shape: f32[1,32], index: 3, kind: input, shape index: {}]
  %s4 = inlined_call_operand.<no memory space> [shape: f32[1,1], index: 4, kind: input, shape index: {}]
  %s5 = inlined_call_operand.vmem [shape: f32[8,1], index: 5, kind: output, shape index: {}]
  %s6 = sld [smem:[#allocation0]]
  $region42: #{tpu_custom_call.1} parent=0
    _
  %s8 = ssub.s32 1, %s6
  %s9 = scalar_select 0, %s8, %s6
  %v10 = vstv %s4
  %11 = vst [vmem:[#allocation2] sm:$0x1] %v10
  $region1: #{tpu_custom_call.1} parent=0
    #allocation3 [shape = 'u8[73728]{0}', space=vmem, size = 0x12000, scoped, tag = 'input window, operand 0, single buffered']
    #allocation4 [shape = 's32[1]{0}', space=sflag, size = 0x4, scoped, tag = 'scoped memory for tpu_custom_call.1']
    #allocation5 [shape = 'u8[16384]{0}', space=vmem, size = 0x4000, scoped, tag = 'input window, operand 1, single buffered']
    #allocation6 [shape = 's32[1]{0}', space=sflag, size = 0x4, scoped, tag = 'scoped memory for tpu_custom_call.1']
    #allocation7 [shape = 'u8[16384]{0}', space=vmem, size = 0x4000, scoped, tag = 'input window, operand 2, single buffered']
    %12 = vsyncpa [#allocation4], 0
    %13 = vsyncpa [#allocation6], 0
    // Predicated region
    $region2: #{tpu_custom_call.1} parent=1 // pred_check
      _
    $region3: #{tpu_custom_call.1} parent=1 // pred_check_branch
      %15 = sbr.rel (0) target = $region5
    $region4: #{tpu_custom_call.1} parent=1 // pred_region
      %s17 = ssub.s32 2304, 2304
      %18 = vsyncadd [#allocation4], %s17
      %s19 = sshll.u32 [#allocation3], 4
      %s20 = int_to_ptr.vmem [resolvable:$true] %s19
      %25 = dma.hbm_to_vmem [thread:$0]  %s0, 2304, %s20, [#allocation4], 256, 256, 16
    $region5: #{tpu_custom_call.1} parent=1 // pred_fallthru
      _
    // Predicated region
    $region6: #{tpu_custom_call.1} parent=1 // pred_check
      _
    $region7: #{tpu_custom_call.1} parent=1 // pred_check_branch
      %27 = sbr.rel (0) target = $region9
    $region8: #{tpu_custom_call.1} parent=1 // pred_region
      %s29 = ssub.s32 512, 512
      %30 = vsyncadd [#allocation6], %s29
      %s31 = sshll.u32 [#allocation5], 4
      %s32 = int_to_ptr.vmem [resolvable:$true] %s31
      %37 = dma.hbm_to_vmem [thread:$0]  %s1, 512, %s32, [#allocation6], 128, 128, 8
    $region9: #{tpu_custom_call.1} parent=1 // pred_fallthru
      _
    // Predicated region
    $region10: #{tpu_custom_call.1} parent=1 // pred_check
      _
    $region11: #{tpu_custom_call.1} parent=1 // pred_check_branch
      %39 = sbr.rel (0) target = $region13
    $region12: #{tpu_custom_call.1} parent=1 // pred_region
      %s41 = ssub.s32 512, 512
      %42 = vsyncadd [#allocation6], %s41
      %s43 = sshll.u32 [#allocation7], 4
      %s44 = int_to_ptr.vmem [resolvable:$true] %s43
      %49 = dma.hbm_to_vmem [thread:$0]  %s2, 512, %s44, [#allocation6], 128, 128, 8
    $region13: #{tpu_custom_call.1} parent=1 // pred_fallthru
      _
    // Predicated region
    $region14: #{tpu_custom_call.1} parent=1 // pred_check
      _
    $region15: #{tpu_custom_call.1} parent=1 // pred_check_branch
      %51 = sbr.rel (0) target = $region17
    $region16: #{tpu_custom_call.1} parent=1 // pred_region
      _
    $region17: #{tpu_custom_call.1} parent=1 // pred_fallthru
      _
    // Predicated region
    $region18: #{tpu_custom_call.1} parent=1 // pred_check
      _
    $region19: #{tpu_custom_call.1} parent=1 // pred_check_branch
      %53 = sbr.rel (0) target = $region21
    $region20: #{tpu_custom_call.1} parent=1 // pred_region
      _
    $region21: #{tpu_custom_call.1} parent=1 // pred_fallthru
      _
    // Predicated region
    $region22: #{tpu_custom_call.1} parent=1 // pred_check
      _
    $region23: #{tpu_custom_call.1} parent=1 // pred_check_branch
      %55 = sbr.rel (0) target = $region25
    $region24: #{tpu_custom_call.1} parent=1 // pred_region
      %56 = dma.done [#allocation4], 2304
    $region25: #{tpu_custom_call.1} parent=1 // pred_fallthru
      _
    // Predicated region
    $region26: #{tpu_custom_call.1} parent=1 // pred_check
      _
    $region27: #{tpu_custom_call.1} parent=1 // pred_check_branch
      %58 = sbr.rel (0) target = $region29
    $region28: #{tpu_custom_call.1} parent=1 // pred_region
      %59 = dma.done [#allocation6], 512
    $region29: #{tpu_custom_call.1} parent=1 // pred_fallthru
      _
    // Predicated region
    $region30: #{tpu_custom_call.1} parent=1 // pred_check
      _
    $region31: #{tpu_custom_call.1} parent=1 // pred_check_branch
      %61 = sbr.rel (0) target = $region33
    $region32: #{tpu_custom_call.1} parent=1 // pred_region
      %62 = dma.done [#allocation6], 512
    $region33: #{tpu_custom_call.1} parent=1 // pred_fallthru
      _
    %v64 = vld [vmem:[#allocation5] sm:$0xff]
    %v65 = vld [vmem:[#allocation5 + $0x8] sm:$0xff]
    %v66 = vld [vmem:[#allocation5 + $0x10] sm:$0xff]
    %v67 = vld [vmem:[#allocation5 + $0x18] sm:$0xff]
    %v68 = vld [vmem:[#allocation7] sm:$0xff]
    %v69 = vld [vmem:[#allocation7 + $0x8] sm:$0xff]
    %v70 = vld [vmem:[#allocation7 + $0x10] sm:$0xff]
    %v71 = vld [vmem:[#allocation7 + $0x18] sm:$0xff]
    %v72 = vld [vmem:[#allocation3] sm:$0xff]
    %v73 = vtanh.pop %v72
    %v74 = vmul.f32 %v73, 0.5
    %v75 = vadd.f32 %v74, 0.5
    %v76 = vmul.f32 %v75, 0.0
    %78 = vrot.lane.b32.xlu0 %v73, 64
    %v79 = vpop.permute.xlu0 %78
    %v81 = vmul.f32 %v75, %v79
    %83 = vrot.lane.b32.xlu0 %v81, 32
    %v84 = vpop.permute.xlu0 %83
    %v86 = vadd.f32 %v76, %v84
    %v87 = vtanh.pop %v86
    %89 = vrot.lane.b32.xlu0 %v87, 64
    %v90 = vpop.permute.xlu0 %89
    %v92 = vmul.f32 %v75, %v90
    %v93 = vpack.c.bf16 %v92, %v92
    %v98 = vunpack.c.l.b16 %v68
    %v99 = vunpack.c.h.b16 %v68
    %v100 = vunpack.c.l.b16 %v69
    %v101 = vunpack.c.h.b16 %v69
    %v102 = vunpack.c.l.b16 %v70
    %v103 = vunpack.c.h.b16 %v70
    %v104 = vunpack.c.l.b16 %v71
    %v105 = vunpack.c.h.b16 %v71
    %v106 = vpack.c.b16 %v100, %v98
    %v107 = vpack.c.b16 %v101, %v99
    %v108 = vpack.c.b16 %v104, %v102
    %v109 = vpack.c.b16 %v105, %v103
    %vm114 = vcmask 261120
    %v116 = vsel %vm114, 0, 0
    %118 = vmatprep.subr.bf16.mxu0 %v107
    %119 = vmatpush1.bf16.msra.mxu0 %v106
    %120 = vmatprep.subr.bf16.mxu0 %v109
    %121 = vmatpush1.bf16.msra.mxu0 %v108
    %122 = vmatprep.subr.bf16.mxu0 0
    %123 = vmatpush1.bf16.msra.mxu0 0
    %124 = vmatprep.subr.bf16.mxu0 0
    %125 = vmatpush1.bf16.msra.mxu0 0
    %126 = vmatprep.subr.bf16.mxu0 0
    %127 = vmatpush1.bf16.msra.mxu0 0
    %128 = vmatprep.subr.bf16.mxu0 0
    %129 = vmatpush1.bf16.msra.mxu0 0
    %130 = vmatprep.subr.bf16.mxu0 0
    %131 = vmatpush1.bf16.msra.mxu0 0
    %132 = vmatprep.subr.bf16.mxu0 0
    %133 = vmatpush1.bf16.msra.mxu0 0
    %134 = vmatprep.subr.bf16.mxu0 0
    %135 = vmatpush1.bf16.msra.mxu0 0
    %136 = vmatprep.subr.bf16.mxu0 0
    %137 = vmatpush1.bf16.msra.mxu0 0
    %138 = vmatprep.subr.bf16.mxu0 0
    %139 = vmatpush1.bf16.msra.mxu0 0
    %140 = vmatprep.subr.bf16.mxu0 0
    %141 = vmatpush1.bf16.msra.mxu0 0
    %142 = vmatprep.subr.bf16.mxu0 0
    %143 = vmatpush1.bf16.msra.mxu0 0
    %144 = vmatprep.subr.bf16.mxu0 0
    %145 = vmatpush1.bf16.msra.mxu0 0
    %146 = vmatprep.subr.bf16.mxu0 0
    %147 = vmatpush1.bf16.msra.mxu0 0
    %148 = vmatprep.subr.bf16.mxu0 0
    %149 = vmatpush1.bf16.msra.mxu0 0
    %150 = vmatprep.mubr.bf16.mxu0 0
    %151 = vmatmul.mubr.bf16.gmra.mrb[0].mxu0 %v116
    %v152 = vpop.f32.mrb[0].mxu0
    %v153 = vadd.f32 0.0, %v152
    %v154 = vpop.f32.mrb[0].mxu0
    %v155 = vadd.f32 0.0, %v154
    %v156 = vpop.f32.mrb[0].mxu0
    %v157 = vpop.f32.mrb[0].mxu0
    %158 = vdwg.mxu0
    %160 = vrot.lane.b32.xlu0 %v93, 32
    %v161 = vpop.permute.xlu0 %160
    %v166 = vunpack.c.l.b16 %v64
    %v167 = vunpack.c.h.b16 %v64
    %v168 = vunpack.c.l.b16 %v65
    %v169 = vunpack.c.h.b16 %v65
    %v170 = vunpack.c.l.b16 %v66
    %v171 = vunpack.c.h.b16 %v66
    %v172 = vunpack.c.l.b16 %v67
    %v173 = vunpack.c.h.b16 %v67
    %v174 = vpack.c.b16 %v168, %v166
    %v175 = vpack.c.b16 %v169, %v167
    %v176 = vpack.c.b16 %v172, %v170
    %v177 = vpack.c.b16 %v173, %v171
    %v183 = vsel %vm114, %v161, 0
    %185 = vmatprep.subr.bf16.mxu0 %v175
    %186 = vmatpush1.bf16.msra.mxu0 %v174
    %187 = vmatprep.subr.bf16.mxu0 %v177
    %188 = vmatpush1.bf16.msra.mxu0 %v176
    %189 = vmatprep.subr.bf16.mxu0 0
    %190 = vmatpush1.bf16.msra.mxu0 0
    %191 = vmatprep.subr.bf16.mxu0 0
    %192 = vmatpush1.bf16.msra.mxu0 0
    %193 = vmatprep.subr.bf16.mxu0 0
    %194 = vmatpush1.bf16.msra.mxu0 0
    %195 = vmatprep.subr.bf16.mxu0 0
    %196 = vmatpush1.bf16.msra.mxu0 0
    %197 = vmatprep.subr.bf16.mxu0 0
    %198 = vmatpush1.bf16.msra.mxu0 0
    %199 = vmatprep.subr.bf16.mxu0 0
    %200 = vmatpush1.bf16.msra.mxu0 0
    %201 = vmatprep.subr.bf16.mxu0 0
    %202 = vmatpush1.bf16.msra.mxu0 0
    %203 = vmatprep.subr.bf16.mxu0 0
    %204 = vmatpush1.bf16.msra.mxu0 0
    %205 = vmatprep.subr.bf16.mxu0 0
    %206 = vmatpush1.bf16.msra.mxu0 0
    %207 = vmatprep.subr.bf16.mxu0 0
    %208 = vmatpush1.bf16.msra.mxu0 0
    %209 = vmatprep.subr.bf16.mxu0 0
    %210 = vmatpush1.bf16.msra.mxu0 0
    %211 = vmatprep.subr.bf16.mxu0 0
    %212 = vmatpush1.bf16.msra.mxu0 0
    %213 = vmatprep.subr.bf16.mxu0 0
    %214 = vmatpush1.bf16.msra.mxu0 0
    %215 = vmatprep.subr.bf16.mxu0 0
    %216 = vmatpush1.bf16.msra.mxu0 0
    %217 = vmatprep.mubr.bf16.mxu0 0
    %218 = vmatmul.mubr.bf16.gmra.mrb[0].mxu0 %v183
    %v219 = vpop.f32.mrb[0].mxu0
    %v220 = vadd.f32 %v153, %v219
    %v221 = vpop.f32.mrb[0].mxu0
    %v222 = vadd.f32 %v155, %v221
    %v223 = vpop.f32.mrb[0].mxu0
    %v224 = vpop.f32.mrb[0].mxu0
    %225 = vdwg.mxu0
    %s226 = scalar_lea.vmem [#allocation3], 16
    %v227 = vld [vmem:[%s226] sm:$0xff]
    %v228 = vld [vmem:[%s226 + $0x8] sm:$0xff]
    %v229 = vadd.f32 %v220, %v227
    %v230 = vadd.f32 %v222, %v228
    %v231 = vtanh.pop %v229
    %v232 = vtanh.pop %v230
    %v233 = vmul.f32 %v231, 0.5
    %v234 = vmul.f32 %v232, 0.5
    %v235 = vadd.f32 %v233, 0.5
    %v236 = vadd.f32 %v234, 0.5
    %v237 = vmul.f32 %v236, 0.0
    %239 = vrot.lane.b32.xlu0 %v232, 64
    %v240 = vpop.permute.xlu0 %239
    %v242 = vmul.f32 %v236, %v240
    %244 = vrot.lane.b32.xlu0 %v242, 32
    %v245 = vpop.permute.xlu0 %244
    %v247 = vadd.f32 %v237, %v245
    %v248 = vtanh.pop %v247
    %250 = vrot.lane.b32.xlu0 %v248, 64
    %v251 = vpop.permute.xlu0 %250
    %v253 = vmul.f32 %v236, %v251
    %v254 = vmul.f32 %v235, %v86
    %256 = vrot.lane.b32.xlu0 %v231, 64
    %v257 = vpop.permute.xlu0 %256
    %v259 = vmul.f32 %v235, %v257
    %261 = vrot.lane.b32.xlu0 %v259, 32
    %v262 = vpop.permute.xlu0 %261
    %v264 = vadd.f32 %v254, %v262
    %v265 = vtanh.pop %v264
    %267 = vrot.lane.b32.xlu0 %v265, 64
    %v268 = vpop.permute.xlu0 %267
    %v270 = vmul.f32 %v235, %v268
    %v271 = vpack.c.bf16 %v270, %v270
    %v272 = vpack.c.bf16 %v253, %v253
    %274 = vrot.lane.b32.xlu0 %v272, 32
    %v275 = vpop.permute.xlu0 %274
    %v277 = vsel %vm114, %v275, 0
    %279 = vmatprep.subr.bf16.mxu0 %v107
    %280 = vmatpush1.bf16.msra.mxu0 %v106
    %281 = vmatprep.subr.bf16.mxu0 %v109
    %282 = vmatpush1.bf16.msra.mxu0 %v108
    %283 = vmatprep.subr.bf16.mxu0 0
    %284 = vmatpush1.bf16.msra.mxu0 0
    %285 = vmatprep.subr.bf16.mxu0 0
    %286 = vmatpush1.bf16.msra.mxu0 0
    %287 = vmatprep.subr.bf16.mxu0 0
    %288 = vmatpush1.bf16.msra.mxu0 0
    %289 = vmatprep.subr.bf16.mxu0 0
    %290 = vmatpush1.bf16.msra.mxu0 0
    %291 = vmatprep.subr.bf16.mxu0 0
    %292 = vmatpush1.bf16.msra.mxu0 0
    %293 = vmatprep.subr.bf16.mxu0 0
    %294 = vmatpush1.bf16.msra.mxu0 0
    %295 = vmatprep.subr.bf16.mxu0 0
    %296 = vmatpush1.bf16.msra.mxu0 0
    %297 = vmatprep.subr.bf16.mxu0 0
    %298 = vmatpush1.bf16.msra.mxu0 0
    %299 = vmatprep.subr.bf16.mxu0 0
    %300 = vmatpush1.bf16.msra.mxu0 0
    %301 = vmatprep.subr.bf16.mxu0 0
    %302 = vmatpush1.bf16.msra.mxu0 0
    %303 = vmatprep.subr.bf16.mxu0 0
    %304 = vmatpush1.bf16.msra.mxu0 0
    %305 = vmatprep.subr.bf16.mxu0 0
    %306 = vmatpush1.bf16.msra.mxu0 0
    %307 = vmatprep.subr.bf16.mxu0 0
    %308 = vmatpush1.bf16.msra.mxu0 0
    %309 = vmatprep.subr.bf16.mxu0 0
    %310 = vmatpush1.bf16.msra.mxu0 0
    %311 = vmatprep.mubr.bf16.mxu0 0
    %312 = vmatmul.mubr.bf16.gmra.mrb[0].mxu0 %v277
    %v313 = vpop.f32.mrb[0].mxu0
    %v314 = vadd.f32 0.0, %v313
    %v315 = vpop.f32.mrb[0].mxu0
    %v316 = vadd.f32 0.0, %v315
    %v317 = vpop.f32.mrb[0].mxu0
    %v318 = vpop.f32.mrb[0].mxu0
    %319 = vdwg.mxu0
    %321 = vrot.lane.b32.xlu0 %v271, 32
    %v322 = vpop.permute.xlu0 %321
    %v324 = vsel %vm114, %v322, 0
    %326 = vmatprep.subr.bf16.mxu0 %v175
    %327 = vmatpush1.bf16.msra.mxu0 %v174
    %328 = vmatprep.subr.bf16.mxu0 %v177
    %329 = vmatpush1.bf16.msra.mxu0 %v176
    %330 = vmatprep.subr.bf16.mxu0 0
    %331 = vmatpush1.bf16.msra.mxu0 0
    %332 = vmatprep.subr.bf16.mxu0 0
    %333 = vmatpush1.bf16.msra.mxu0 0
    %334 = vmatprep.subr.bf16.mxu0 0
    %335 = vmatpush1.bf16.msra.mxu0 0
    %336 = vmatprep.subr.bf16.mxu0 0
    %337 = vmatpush1.bf16.msra.mxu0 0
    %338 = vmatprep.subr.bf16.mxu0 0
    %339 = vmatpush1.bf16.msra.mxu0 0
    %340 = vmatprep.subr.bf16.mxu0 0
    %341 = vmatpush1.bf16.msra.mxu0 0
    %342 = vmatprep.subr.bf16.mxu0 0
    %343 = vmatpush1.bf16.msra.mxu0 0
    %344 = vmatprep.subr.bf16.mxu0 0
    %345 = vmatpush1.bf16.msra.mxu0 0
    %346 = vmatprep.subr.bf16.mxu0 0
    %347 = vmatpush1.bf16.msra.mxu0 0
    %348 = vmatprep.subr.bf16.mxu0 0
    %349 = vmatpush1.bf16.msra.mxu0 0
    %350 = vmatprep.subr.bf16.mxu0 0
    %351 = vmatpush1.bf16.msra.mxu0 0
    %352 = vmatprep.subr.bf16.mxu0 0
    %353 = vmatpush1.bf16.msra.mxu0 0
    %354 = vmatprep.subr.bf16.mxu0 0
    %355 = vmatpush1.bf16.msra.mxu0 0
    %356 = vmatprep.subr.bf16.mxu0 0
    %357 = vmatpush1.bf16.msra.mxu0 0
    %358 = vmatprep.mubr.bf16.mxu0 0
    %359 = vmatmul.mubr.bf16.gmra.mrb[0].mxu0 %v324
    %v360 = vpop.f32.mrb[0].mxu0
    %v361 = vadd.f32 %v314, %v360
    %v362 = vpop.f32.mrb[0].mxu0
    %v363 = vadd.f32 %v316, %v362
    %v364 = vpop.f32.mrb[0].mxu0
    %v365 = vpop.f32.mrb[0].mxu0
    %366 = vdwg.mxu0
    %s367 = scalar_lea.vmem [#allocation3], 32
    %v368 = vld [vmem:[%s367] sm:$0xff]
    %v369 = vld [vmem:[%s367 + $0x8] sm:$0xff]
    %v370 = vadd.f32 %v361, %v368
    %v371 = vadd.f32 %v363, %v369
    %v372 = vtanh.pop %v370
    %v373 = vtanh.pop %v371
    %v374 = vmul.f32 %v372, 0.5
    %v375 = vmul.f32 %v373, 0.5
    %v376 = vadd.f32 %v374, 0.5
    %v377 = vadd.f32 %v375, 0.5
    %v378 = vmul.f32 %v377, %v247
    %380 = vrot.lane.b32.xlu0 %v373, 64
    %v381 = vpop.permute.xlu0 %380
    %v383 = vmul.f32 %v377, %v381
    %385 = vrot.lane.b32.xlu0 %v383, 32
    %v386 = vpop.permute.xlu0 %385
    %v388 = vadd.f32 %v378, %v386
    %v389 = vtanh.pop %v388
    %391 = vrot.lane.b32.xlu0 %v389, 64
    %v392 = vpop.permute.xlu0 %391
    %v394 = vmul.f32 %v377, %v392
    %v395 = vmul.f32 %v376, %v264
    %397 = vrot.lane.b32.xlu0 %v372, 64
    %v398 = vpop.permute.xlu0 %397
    %v400 = vmul.f32 %v376, %v398
    %402 = vrot.lane.b32.xlu0 %v400, 32
    %v403 = vpop.permute.xlu0 %402
    %v405 = vadd.f32 %v395, %v403
    %v406 = vtanh.pop %v405
    %408 = vrot.lane.b32.xlu0 %v406, 64
    %v409 = vpop.permute.xlu0 %408
    %v411 = vmul.f32 %v376, %v409
    %v412 = vpack.c.bf16 %v411, %v411
    %v413 = vpack.c.bf16 %v394, %v394
    %415 = vrot.lane.b32.xlu0 %v413, 32
    %v416 = vpop.permute.xlu0 %415
    %v418 = vsel %vm114, %v416, 0
    %420 = vmatprep.subr.bf16.mxu0 %v107
    %421 = vmatpush1.bf16.msra.mxu0 %v106
    %422 = vmatprep.subr.bf16.mxu0 %v109
    %423 = vmatpush1.bf16.msra.mxu0 %v108
    %424 = vmatprep.subr.bf16.mxu0 0
    %425 = vmatpush1.bf16.msra.mxu0 0
    %426 = vmatprep.subr.bf16.mxu0 0
    %427 = vmatpush1.bf16.msra.mxu0 0
    %428 = vmatprep.subr.bf16.mxu0 0
    %429 = vmatpush1.bf16.msra.mxu0 0
    %430 = vmatprep.subr.bf16.mxu0 0
    %431 = vmatpush1.bf16.msra.mxu0 0
    %432 = vmatprep.subr.bf16.mxu0 0
    %433 = vmatpush1.bf16.msra.mxu0 0
    %434 = vmatprep.subr.bf16.mxu0 0
    %435 = vmatpush1.bf16.msra.mxu0 0
    %436 = vmatprep.subr.bf16.mxu0 0
    %437 = vmatpush1.bf16.msra.mxu0 0
    %438 = vmatprep.subr.bf16.mxu0 0
    %439 = vmatpush1.bf16.msra.mxu0 0
    %440 = vmatprep.subr.bf16.mxu0 0
    %441 = vmatpush1.bf16.msra.mxu0 0
    %442 = vmatprep.subr.bf16.mxu0 0
    %443 = vmatpush1.bf16.msra.mxu0 0
    %444 = vmatprep.subr.bf16.mxu0 0
    %445 = vmatpush1.bf16.msra.mxu0 0
    %446 = vmatprep.subr.bf16.mxu0 0
    %447 = vmatpush1.bf16.msra.mxu0 0
    %448 = vmatprep.subr.bf16.mxu0 0
    %449 = vmatpush1.bf16.msra.mxu0 0
    %450 = vmatprep.subr.bf16.mxu0 0
    %451 = vmatpush1.bf16.msra.mxu0 0
    %452 = vmatprep.mubr.bf16.mxu0 0
    %453 = vmatmul.mubr.bf16.gmra.mrb[0].mxu0 %v418
    %v454 = vpop.f32.mrb[0].mxu0
    %v455 = vadd.f32 0.0, %v454
    %v456 = vpop.f32.mrb[0].mxu0
    %v457 = vadd.f32 0.0, %v456
    %v458 = vpop.f32.mrb[0].mxu0
    %v459 = vpop.f32.mrb[0].mxu0
    %460 = vdwg.mxu0
    %462 = vrot.lane.b32.xlu0 %v412, 32
    %v463 = vpop.permute.xlu0 %462
    %v465 = vsel %vm114, %v463, 0
    %467 = vmatprep.subr.bf16.mxu0 %v175
    %468 = vmatpush1.bf16.msra.mxu0 %v174
    %469 = vmatprep.subr.bf16.mxu0 %v177
    %470 = vmatpush1.bf16.msra.mxu0 %v176
    %471 = vmatprep.subr.bf16.mxu0 0
    %472 = vmatpush1.bf16.msra.mxu0 0
    %473 = vmatprep.subr.bf16.mxu0 0
    %474 = vmatpush1.bf16.msra.mxu0 0
    %475 = vmatprep.subr.bf16.mxu0 0
    %476 = vmatpush1.bf16.msra.mxu0 0
    %477 = vmatprep.subr.bf16.mxu0 0
    %478 = vmatpush1.bf16.msra.mxu0 0
    %479 = vmatprep.subr.bf16.mxu0 0
    %480 = vmatpush1.bf16.msra.mxu0 0
    %481 = vmatprep.subr.bf16.mxu0 0
    %482 = vmatpush1.bf16.msra.mxu0 0
    %483 = vmatprep.subr.bf16.mxu0 0
    %484 = vmatpush1.bf16.msra.mxu0 0
    %485 = vmatprep.subr.bf16.mxu0 0
    %486 = vmatpush1.bf16.msra.mxu0 0
    %487 = vmatprep.subr.bf16.mxu0 0
    %488 = vmatpush1.bf16.msra.mxu0 0
    %489 = vmatprep.subr.bf16.mxu0 0
    %490 = vmatpush1.bf16.msra.mxu0 0
    %491 = vmatprep.subr.bf16.mxu0 0
    %492 = vmatpush1.bf16.msra.mxu0 0
    %493 = vmatprep.subr.bf16.mxu0 0
    %494 = vmatpush1.bf16.msra.mxu0 0
    %495 = vmatprep.subr.bf16.mxu0 0
    %496 = vmatpush1.bf16.msra.mxu0 0
    %497 = vmatprep.subr.bf16.mxu0 0
    %498 = vmatpush1.bf16.msra.mxu0 0
    %499 = vmatprep.mubr.bf16.mxu0 0
    %500 = vmatmul.mubr.bf16.gmra.mrb[0].mxu0 %v465
    %v501 = vpop.f32.mrb[0].mxu0
    %v502 = vadd.f32 %v455, %v501
    %v503 = vpop.f32.mrb[0].mxu0
    %v504 = vadd.f32 %v457, %v503
    %v505 = vpop.f32.mrb[0].mxu0
    %v506 = vpop.f32.mrb[0].mxu0
    %507 = vdwg.mxu0
    %s508 = scalar_lea.vmem [#allocation3], 48
    %v509 = vld [vmem:[%s508] sm:$0xff]
    %v510 = vld [vmem:[%s508 + $0x8] sm:$0xff]
    %v511 = vadd.f32 %v502, %v509
    %v512 = vadd.f32 %v504, %v510
    %v513 = vtanh.pop %v511
    %v514 = vtanh.pop %v512
    %v515 = vmul.f32 %v513, 0.5
    %v516 = vmul.f32 %v514, 0.5
    %v517 = vadd.f32 %v515, 0.5
    %v518 = vadd.f32 %v516, 0.5
    %v519 = vmul.f32 %v518, %v388
    %521 = vrot.lane.b32.xlu0 %v514, 64
    %v522 = vpop.permute.xlu0 %521
    %v524 = vmul.f32 %v518, %v522
    %526 = vrot.lane.b32.xlu0 %v524, 32
    %v527 = vpop.permute.xlu0 %526
    %v529 = vadd.f32 %v519, %v527
    %v530 = vtanh.pop %v529
    %532 = vrot.lane.b32.xlu0 %v530, 64
    %v533 = vpop.permute.xlu0 %532
    %v535 = vmul.f32 %v518, %v533
    %v536 = vmul.f32 %v517, %v405
    %538 = vrot.lane.b32.xlu0 %v513, 64
    %v539 = vpop.permute.xlu0 %538
    %v541 = vmul.f32 %v517, %v539
    %543 = vrot.lane.b32.xlu0 %v541, 32
    %v544 = vpop.permute.xlu0 %543
    %v546 = vadd.f32 %v536, %v544
    %v547 = vtanh.pop %v546
    %549 = vrot.lane.b32.xlu0 %v547, 64
    %v550 = vpop.permute.xlu0 %549
    %v552 = vmul.f32 %v517, %v550
    %v553 = vpack.c.bf16 %v552, %v552
    %v554 = vpack.c.bf16 %v535, %v535
    %556 = vrot.lane.b32.xlu0 %v554, 32
    %v557 = vpop.permute.xlu0 %556
    %v559 = vsel %vm114, %v557, 0
    %561 = vmatprep.subr.bf16.mxu0 %v107
    %562 = vmatpush1.bf16.msra.mxu0 %v106
    %563 = vmatprep.subr.bf16.mxu0 %v109
    %564 = vmatpush1.bf16.msra.mxu0 %v108
    %565 = vmatprep.subr.bf16.mxu0 0
    %566 = vmatpush1.bf16.msra.mxu0 0
    %567 = vmatprep.subr.bf16.mxu0 0
    %568 = vmatpush1.bf16.msra.mxu0 0
    %569 = vmatprep.subr.bf16.mxu0 0
    %570 = vmatpush1.bf16.msra.mxu0 0
    %571 = vmatprep.subr.bf16.mxu0 0
    %572 = vmatpush1.bf16.msra.mxu0 0
    %573 = vmatprep.subr.bf16.mxu0 0
    %574 = vmatpush1.bf16.msra.mxu0 0
    %575 = vmatprep.subr.bf16.mxu0 0
    %576 = vmatpush1.bf16.msra.mxu0 0
    %577 = vmatprep.subr.bf16.mxu0 0
    %578 = vmatpush1.bf16.msra.mxu0 0
    %579 = vmatprep.subr.bf16.mxu0 0
    %580 = vmatpush1.bf16.msra.mxu0 0
    %581 = vmatprep.subr.bf16.mxu0 0
    %582 = vmatpush1.bf16.msra.mxu0 0
    %583 = vmatprep.subr.bf16.mxu0 0
    %584 = vmatpush1.bf16.msra.mxu0 0
    %585 = vmatprep.subr.bf16.mxu0 0
    %586 = vmatpush1.bf16.msra.mxu0 0
    %587 = vmatprep.subr.bf16.mxu0 0
    %588 = vmatpush1.bf16.msra.mxu0 0
    %589 = vmatprep.subr.bf16.mxu0 0
    %590 = vmatpush1.bf16.msra.mxu0 0
    %591 = vmatprep.subr.bf16.mxu0 0
    %592 = vmatpush1.bf16.msra.mxu0 0
    %593 = vmatprep.mubr.bf16.mxu0 0
    %594 = vmatmul.mubr.bf16.gmra.mrb[0].mxu0 %v559
    %v595 = vpop.f32.mrb[0].mxu0
    %v596 = vadd.f32 0.0, %v595
    %v597 = vpop.f32.mrb[0].mxu0
    %v598 = vadd.f32 0.0, %v597
    %v599 = vpop.f32.mrb[0].mxu0
    %v600 = vpop.f32.mrb[0].mxu0
    %601 = vdwg.mxu0
    %603 = vrot.lane.b32.xlu0 %v553, 32
    %v604 = vpop.permute.xlu0 %603
    %v606 = vsel %vm114, %v604, 0
    %608 = vmatprep.subr.bf16.mxu0 %v175
    %609 = vmatpush1.bf16.msra.mxu0 %v174
    %610 = vmatprep.subr.bf16.mxu0 %v177
    %611 = vmatpush1.bf16.msra.mxu0 %v176
    %612 = vmatprep.subr.bf16.mxu0 0
    %613 = vmatpush1.bf16.msra.mxu0 0
    %614 = vmatprep.subr.bf16.mxu0 0
    %615 = vmatpush1.bf16.msra.mxu0 0
    %616 = vmatprep.subr.bf16.mxu0 0
    %617 = vmatpush1.bf16.msra.mxu0 0
    %618 = vmatprep.subr.bf16.mxu0 0
    %619 = vmatpush1.bf16.msra.mxu0 0
    %620 = vmatprep.subr.bf16.mxu0 0
    %621 = vmatpush1.bf16.msra.mxu0 0
    %622 = vmatprep.subr.bf16.mxu0 0
    %623 = vmatpush1.bf16.msra.mxu0 0
    %624 = vmatprep.subr.bf16.mxu0 0
    %625 = vmatpush1.bf16.msra.mxu0 0
    %626 = vmatprep.subr.bf16.mxu0 0
    %627 = vmatpush1.bf16.msra.mxu0 0
    %628 = vmatprep.subr.bf16.mxu0 0
    %629 = vmatpush1.bf16.msra.mxu0 0
    %630 = vmatprep.subr.bf16.mxu0 0
    %631 = vmatpush1.bf16.msra.mxu0 0
    %632 = vmatprep.subr.bf16.mxu0 0
    %633 = vmatpush1.bf16.msra.mxu0 0
    %634 = vmatprep.subr.bf16.mxu0 0
    %635 = vmatpush1.bf16.msra.mxu0 0
    %636 = vmatprep.subr.bf16.mxu0 0
    %637 = vmatpush1.bf16.msra.mxu0 0
    %638 = vmatprep.subr.bf16.mxu0 0
    %639 = vmatpush1.bf16.msra.mxu0 0
    %640 = vmatprep.mubr.bf16.mxu0 0
    %641 = vmatmul.mubr.bf16.gmra.mrb[0].mxu0 %v606
    %v642 = vpop.f32.mrb[0].mxu0
    %v643 = vadd.f32 %v596, %v642
    %v644 = vpop.f32.mrb[0].mxu0
    %v645 = vadd.f32 %v598, %v644
    %v646 = vpop.f32.mrb[0].mxu0
    %v647 = vpop.f32.mrb[0].mxu0
    %648 = vdwg.mxu0
    %s649 = scalar_lea.vmem [#allocation3], 64
    %v650 = vld [vmem:[%s649] sm:$0xff]
    %v651 = vld [vmem:[%s649 + $0x8] sm:$0xff]
    %v652 = vadd.f32 %v643, %v650
    %v653 = vadd.f32 %v645, %v651
    %v654 = vtanh.pop %v652
    %v655 = vtanh.pop %v653
    %v656 = vmul.f32 %v654, 0.5
    %v657 = vmul.f32 %v655, 0.5
    %v658 = vadd.f32 %v656, 0.5
    %v659 = vadd.f32 %v657, 0.5
    %v660 = vmul.f32 %v659, %v529
    %662 = vrot.lane.b32.xlu0 %v655, 64
    %v663 = vpop.permute.xlu0 %662
    %v665 = vmul.f32 %v659, %v663
    %667 = vrot.lane.b32.xlu0 %v665, 32
    %v668 = vpop.permute.xlu0 %667
    %v670 = vadd.f32 %v660, %v668
    %v671 = vtanh.pop %v670
    %673 = vrot.lane.b32.xlu0 %v671, 64
    %v674 = vpop.permute.xlu0 %673
    %v676 = vmul.f32 %v659, %v674
    %v677 = vmul.f32 %v658, %v546
    %679 = vrot.lane.b32.xlu0 %v654, 64
    %v680 = vpop.permute.xlu0 %679
    %v682 = vmul.f32 %v658, %v680
    %684 = vrot.lane.b32.xlu0 %v682, 32
    %v685 = vpop.permute.xlu0 %684
    %v687 = vadd.f32 %v677, %v685
    %v688 = vtanh.pop %v687
    %690 = vrot.lane.b32.xlu0 %v688, 64
    %v691 = vpop.permute.xlu0 %690
    %v693 = vmul.f32 %v658, %v691
    %v694 = vpack.c.bf16 %v693, %v693
    %v695 = vpack.c.bf16 %v676, %v676
    %697 = vrot.lane.b32.xlu0 %v695, 32
    %v698 = vpop.permute.xlu0 %697
    %v700 = vsel %vm114, %v698, 0
    %702 = vmatprep.subr.bf16.mxu0 %v107
    %703 = vmatpush1.bf16.msra.mxu0 %v106
    %704 = vmatprep.subr.bf16.mxu0 %v109
    %705 = vmatpush1.bf16.msra.mxu0 %v108
    %706 = vmatprep.subr.bf16.mxu0 0
    %707 = vmatpush1.bf16.msra.mxu0 0
    %708 = vmatprep.subr.bf16.mxu0 0
    %709 = vmatpush1.bf16.msra.mxu0 0
    %710 = vmatprep.subr.bf16.mxu0 0
    %711 = vmatpush1.bf16.msra.mxu0 0
    %712 = vmatprep.subr.bf16.mxu0 0
    %713 = vmatpush1.bf16.msra.mxu0 0
    %714 = vmatprep.subr.bf16.mxu0 0
    %715 = vmatpush1.bf16.msra.mxu0 0
    %716 = vmatprep.subr.bf16.mxu0 0
    %717 = vmatpush1.bf16.msra.mxu0 0
    %718 = vmatprep.subr.bf16.mxu0 0
    %719 = vmatpush1.bf16.msra.mxu0 0
    %720 = vmatprep.subr.bf16.mxu0 0
    %721 = vmatpush1.bf16.msra.mxu0 0
    %722 = vmatprep.subr.bf16.mxu0 0
    %723 = vmatpush1.bf16.msra.mxu0 0
    %724 = vmatprep.subr.bf16.mxu0 0
    %725 = vmatpush1.bf16.msra.mxu0 0
    %726 = vmatprep.subr.bf16.mxu0 0
    %727 = vmatpush1.bf16.msra.mxu0 0
    %728 = vmatprep.subr.bf16.mxu0 0
    %729 = vmatpush1.bf16.msra.mxu0 0
    %730 = vmatprep.subr.bf16.mxu0 0
    %731 = vmatpush1.bf16.msra.mxu0 0
    %732 = vmatprep.subr.bf16.mxu0 0
    %733 = vmatpush1.bf16.msra.mxu0 0
    %734 = vmatprep.mubr.bf16.mxu0 0
    %735 = vmatmul.mubr.bf16.gmra.mrb[0].mxu0 %v700
    %v736 = vpop.f32.mrb[0].mxu0
    %v737 = vadd.f32 0.0, %v736
    %v738 = vpop.f32.mrb[0].mxu0
    %v739 = vadd.f32 0.0, %v738
    %v740 = vpop.f32.mrb[0].mxu0
    %v741 = vpop.f32.mrb[0].mxu0
    %742 = vdwg.mxu0
    %744 = vrot.lane.b32.xlu0 %v694, 32
    %v745 = vpop.permute.xlu0 %744
    %v747 = vsel %vm114, %v745, 0
    %749 = vmatprep.subr.bf16.mxu0 %v175
    %750 = vmatpush1.bf16.msra.mxu0 %v174
    %751 = vmatprep.subr.bf16.mxu0 %v177
    %752 = vmatpush1.bf16.msra.mxu0 %v176
    %753 = vmatprep.subr.bf16.mxu0 0
    %754 = vmatpush1.bf16.msra.mxu0 0
    %755 = vmatprep.subr.bf16.mxu0 0
    %756 = vmatpush1.bf16.msra.mxu0 0
    %757 = vmatprep.subr.bf16.mxu0 0
    %758 = vmatpush1.bf16.msra.mxu0 0
    %759 = vmatprep.subr.bf16.mxu0 0
    %760 = vmatpush1.bf16.msra.mxu0 0
    %761 = vmatprep.subr.bf16.mxu0 0
    %762 = vmatpush1.bf16.msra.mxu0 0
    %763 = vmatprep.subr.bf16.mxu0 0
    %764 = vmatpush1.bf16.msra.mxu0 0
    %765 = vmatprep.subr.bf16.mxu0 0
    %766 = vmatpush1.bf16.msra.mxu0 0
    %767 = vmatprep.subr.bf16.mxu0 0
    %768 = vmatpush1.bf16.msra.mxu0 0
    %769 = vmatprep.subr.bf16.mxu0 0
    %770 = vmatpush1.bf16.msra.mxu0 0
    %771 = vmatprep.subr.bf16.mxu0 0
    %772 = vmatpush1.bf16.msra.mxu0 0
    %773 = vmatprep.subr.bf16.mxu0 0
    %774 = vmatpush1.bf16.msra.mxu0 0
    %775 = vmatprep.subr.bf16.mxu0 0
    %776 = vmatpush1.bf16.msra.mxu0 0
    %777 = vmatprep.subr.bf16.mxu0 0
    %778 = vmatpush1.bf16.msra.mxu0 0
    %779 = vmatprep.subr.bf16.mxu0 0
    %780 = vmatpush1.bf16.msra.mxu0 0
    %781 = vmatprep.mubr.bf16.mxu0 0
    %782 = vmatmul.mubr.bf16.gmra.mrb[0].mxu0 %v747
    %v783 = vpop.f32.mrb[0].mxu0
    %v784 = vadd.f32 %v737, %v783
    %v785 = vpop.f32.mrb[0].mxu0
    %v786 = vadd.f32 %v739, %v785
    %v787 = vpop.f32.mrb[0].mxu0
    %v788 = vpop.f32.mrb[0].mxu0
    %789 = vdwg.mxu0
    %s790 = scalar_lea.vmem [#allocation3], 80
    %v791 = vld [vmem:[%s790] sm:$0xff]
    %v792 = vld [vmem:[%s790 + $0x8] sm:$0xff]
    %v793 = vadd.f32 %v784, %v791
    %v794 = vadd.f32 %v786, %v792
    %v795 = vtanh.pop %v793
    %v796 = vtanh.pop %v794
    %v797 = vmul.f32 %v795, 0.5
    %v798 = vmul.f32 %v796, 0.5
    %v799 = vadd.f32 %v797, 0.5
    %v800 = vadd.f32 %v798, 0.5
    %v801 = vmul.f32 %v800, %v670
    %803 = vrot.lane.b32.xlu0 %v796, 64
    %v804 = vpop.permute.xlu0 %803
    %v806 = vmul.f32 %v800, %v804
    %808 = vrot.lane.b32.xlu0 %v806, 32
    %v809 = vpop.permute.xlu0 %808
    %v811 = vadd.f32 %v801, %v809
    %v812 = vtanh.pop %v811
    %814 = vrot.lane.b32.xlu0 %v812, 64
    %v815 = vpop.permute.xlu0 %814
    %v817 = vmul.f32 %v800, %v815
    %v818 = vmul.f32 %v799, %v687
    %820 = vrot.lane.b32.xlu0 %v795, 64
    %v821 = vpop.permute.xlu0 %820
    %v823 = vmul.f32 %v799, %v821
    %825 = vrot.lane.b32.xlu0 %v823, 32
    %v826 = vpop.permute.xlu0 %825
    %v828 = vadd.f32 %v818, %v826
    %v829 = vtanh.pop %v828
    %831 = vrot.lane.b32.xlu0 %v829, 64
    %v832 = vpop.permute.xlu0 %831
    %v834 = vmul.f32 %v799, %v832
    %v835 = vpack.c.bf16 %v834, %v834
    %v836 = vpack.c.bf16 %v817, %v817
    %838 = vrot.lane.b32.xlu0 %v836, 32
    %v839 = vpop.permute.xlu0 %838
    %v841 = vsel %vm114, %v839, 0
    %843 = vmatprep.subr.bf16.mxu0 %v107
    %844 = vmatpush1.bf16.msra.mxu0 %v106
    %845 = vmatprep.subr.bf16.mxu0 %v109
    %846 = vmatpush1.bf16.msra.mxu0 %v108
    %847 = vmatprep.subr.bf16.mxu0 0
    %848 = vmatpush1.bf16.msra.mxu0 0
    %849 = vmatprep.subr.bf16.mxu0 0
    %850 = vmatpush1.bf16.msra.mxu0 0
    %851 = vmatprep.subr.bf16.mxu0 0
    %852 = vmatpush1.bf16.msra.mxu0 0
    %853 = vmatprep.subr.bf16.mxu0 0
    %854 = vmatpush1.bf16.msra.mxu0 0
    %855 = vmatprep.subr.bf16.mxu0 0
    %856 = vmatpush1.bf16.msra.mxu0 0
    %857 = vmatprep.subr.bf16.mxu0 0
    %858 = vmatpush1.bf16.msra.mxu0 0
    %859 = vmatprep.subr.bf16.mxu0 0
    %860 = vmatpush1.bf16.msra.mxu0 0
    %861 = vmatprep.subr.bf16.mxu0 0
    %862 = vmatpush1.bf16.msra.mxu0 0
    %863 = vmatprep.subr.bf16.mxu0 0
    %864 = vmatpush1.bf16.msra.mxu0 0
    %865 = vmatprep.subr.bf16.mxu0 0
    %866 = vmatpush1.bf16.msra.mxu0 0
    %867 = vmatprep.subr.bf16.mxu0 0
    %868 = vmatpush1.bf16.msra.mxu0 0
    %869 = vmatprep.subr.bf16.mxu0 0
    %870 = vmatpush1.bf16.msra.mxu0 0
    %871 = vmatprep.subr.bf16.mxu0 0
    %872 = vmatpush1.bf16.msra.mxu0 0
    %873 = vmatprep.subr.bf16.mxu0 0
    %874 = vmatpush1.bf16.msra.mxu0 0
    %875 = vmatprep.mubr.bf16.mxu0 0
    %876 = vmatmul.mubr.bf16.gmra.mrb[0].mxu0 %v841
    %v877 = vpop.f32.mrb[0].mxu0
    %v878 = vadd.f32 0.0, %v877
    %v879 = vpop.f32.mrb[0].mxu0
    %v880 = vadd.f32 0.0, %v879
    %v881 = vpop.f32.mrb[0].mxu0
    %v882 = vpop.f32.mrb[0].mxu0
    %883 = vdwg.mxu0
    %885 = vrot.lane.b32.xlu0 %v835, 32
    %v886 = vpop.permute.xlu0 %885
    %v888 = vsel %vm114, %v886, 0
    %890 = vmatprep.subr.bf16.mxu0 %v175
    %891 = vmatpush1.bf16.msra.mxu0 %v174
    %892 = vmatprep.subr.bf16.mxu0 %v177
    %893 = vmatpush1.bf16.msra.mxu0 %v176
    %894 = vmatprep.subr.bf16.mxu0 0
    %895 = vmatpush1.bf16.msra.mxu0 0
    %896 = vmatprep.subr.bf16.mxu0 0
    %897 = vmatpush1.bf16.msra.mxu0 0
    %898 = vmatprep.subr.bf16.mxu0 0
    %899 = vmatpush1.bf16.msra.mxu0 0
    %900 = vmatprep.subr.bf16.mxu0 0
    %901 = vmatpush1.bf16.msra.mxu0 0
    %902 = vmatprep.subr.bf16.mxu0 0
    %903 = vmatpush1.bf16.msra.mxu0 0
    %904 = vmatprep.subr.bf16.mxu0 0
    %905 = vmatpush1.bf16.msra.mxu0 0
    %906 = vmatprep.subr.bf16.mxu0 0
    %907 = vmatpush1.bf16.msra.mxu0 0
    %908 = vmatprep.subr.bf16.mxu0 0
    %909 = vmatpush1.bf16.msra.mxu0 0
    %910 = vmatprep.subr.bf16.mxu0 0
    %911 = vmatpush1.bf16.msra.mxu0 0
    %912 = vmatprep.subr.bf16.mxu0 0
    %913 = vmatpush1.bf16.msra.mxu0 0
    %914 = vmatprep.subr.bf16.mxu0 0
    %915 = vmatpush1.bf16.msra.mxu0 0
    %916 = vmatprep.subr.bf16.mxu0 0
    %917 = vmatpush1.bf16.msra.mxu0 0
    %918 = vmatprep.subr.bf16.mxu0 0
    %919 = vmatpush1.bf16.msra.mxu0 0
    %920 = vmatprep.subr.bf16.mxu0 0
    %921 = vmatpush1.bf16.msra.mxu0 0
    %922 = vmatprep.mubr.bf16.mxu0 0
    %923 = vmatmul.mubr.bf16.gmra.mrb[0].mxu0 %v888
    %v924 = vpop.f32.mrb[0].mxu0
    %v925 = vadd.f32 %v878, %v924
    %v926 = vpop.f32.mrb[0].mxu0
    %v927 = vadd.f32 %v880, %v926
    %v928 = vpop.f32.mrb[0].mxu0
    %v929 = vpop.f32.mrb[0].mxu0
    %930 = vdwg.mxu0
    %s931 = scalar_lea.vmem [#allocation3], 96
    %v932 = vld [vmem:[%s931] sm:$0xff]
    %v933 = vld [vmem:[%s931 + $0x8] sm:$0xff]
    %v934 = vadd.f32 %v925, %v932
    %v935 = vadd.f32 %v927, %v933
    %v936 = vtanh.pop %v934
    %v937 = vtanh.pop %v935
    %v938 = vmul.f32 %v936, 0.5
    %v939 = vmul.f32 %v937, 0.5
    %v940 = vadd.f32 %v938, 0.5
    %v941 = vadd.f32 %v939, 0.5
    %v942 = vmul.f32 %v941, %v811
    %944 = vrot.lane.b32.xlu0 %v937, 64
    %v945 = vpop.permute.xlu0 %944
    %v947 = vmul.f32 %v941, %v945
    %949 = vrot.lane.b32.xlu0 %v947, 32
    %v950 = vpop.permute.xlu0 %949
    %v952 = vadd.f32 %v942, %v950
    %v953 = vtanh.pop %v952
    %955 = vrot.lane.b32.xlu0 %v953, 64
    %v956 = vpop.permute.xlu0 %955
    %v958 = vmul.f32 %v941, %v956
    %v959 = vmul.f32 %v940, %v828
    %961 = vrot.lane.b32.xlu0 %v936, 64
    %v962 = vpop.permute.xlu0 %961
    %v964 = vmul.f32 %v940, %v962
    %966 = vrot.lane.b32.xlu0 %v964, 32
    %v967 = vpop.permute.xlu0 %966
    %v969 = vadd.f32 %v959, %v967
    %v970 = vtanh.pop %v969
    %972 = vrot.lane.b32.xlu0 %v970, 64
    %v973 = vpop.permute.xlu0 %972
    %v975 = vmul.f32 %v940, %v973
    %v976 = vpack.c.bf16 %v975, %v975
    %v977 = vpack.c.bf16 %v958, %v958
    %979 = vrot.lane.b32.xlu0 %v977, 32
    %v980 = vpop.permute.xlu0 %979
    %v982 = vsel %vm114, %v980, 0
    %984 = vmatprep.subr.bf16.mxu0 %v107
    %985 = vmatpush1.bf16.msra.mxu0 %v106
    %986 = vmatprep.subr.bf16.mxu0 %v109
    %987 = vmatpush1.bf16.msra.mxu0 %v108
    %988 = vmatprep.subr.bf16.mxu0 0
    %989 = vmatpush1.bf16.msra.mxu0 0
    %990 = vmatprep.subr.bf16.mxu0 0
    %991 = vmatpush1.bf16.msra.mxu0 0
    %992 = vmatprep.subr.bf16.mxu0 0
    %993 = vmatpush1.bf16.msra.mxu0 0
    %994 = vmatprep.subr.bf16.mxu0 0
    %995 = vmatpush1.bf16.msra.mxu0 0
    %996 = vmatprep.subr.bf16.mxu0 0
    %997 = vmatpush1.bf16.msra.mxu0 0
    %998 = vmatprep.subr.bf16.mxu0 0
    %999 = vmatpush1.bf16.msra.mxu0 0
    %1000 = vmatprep.subr.bf16.mxu0 0
    %1001 = vmatpush1.bf16.msra.mxu0 0
    %1002 = vmatprep.subr.bf16.mxu0 0
    %1003 = vmatpush1.bf16.msra.mxu0 0
    %1004 = vmatprep.subr.bf16.mxu0 0
    %1005 = vmatpush1.bf16.msra.mxu0 0
    %1006 = vmatprep.subr.bf16.mxu0 0
    %1007 = vmatpush1.bf16.msra.mxu0 0
    %1008 = vmatprep.subr.bf16.mxu0 0
    %1009 = vmatpush1.bf16.msra.mxu0 0
    %1010 = vmatprep.subr.bf16.mxu0 0
    %1011 = vmatpush1.bf16.msra.mxu0 0
    %1012 = vmatprep.subr.bf16.mxu0 0
    %1013 = vmatpush1.bf16.msra.mxu0 0
    %1014 = vmatprep.subr.bf16.mxu0 0
    %1015 = vmatpush1.bf16.msra.mxu0 0
    %1016 = vmatprep.mubr.bf16.mxu0 0
    %1017 = vmatmul.mubr.bf16.gmra.mrb[0].mxu0 %v982
    %v1018 = vpop.f32.mrb[0].mxu0
    %v1019 = vadd.f32 0.0, %v1018
    %v1020 = vpop.f32.mrb[0].mxu0
    %v1021 = vadd.f32 0.0, %v1020
    %v1022 = vpop.f32.mrb[0].mxu0
    %v1023 = vpop.f32.mrb[0].mxu0
    %1024 = vdwg.mxu0
    %1026 = vrot.lane.b32.xlu0 %v976, 32
    %v1027 = vpop.permute.xlu0 %1026
    %v1029 = vsel %vm114, %v1027, 0
    %1031 = vmatprep.subr.bf16.mxu0 %v175
    %1032 = vmatpush1.bf16.msra.mxu0 %v174
    %1033 = vmatprep.subr.bf16.mxu0 %v177
    %1034 = vmatpush1.bf16.msra.mxu0 %v176
    %1035 = vmatprep.subr.bf16.mxu0 0
    %1036 = vmatpush1.bf16.msra.mxu0 0
    %1037 = vmatprep.subr.bf16.mxu0 0
    %1038 = vmatpush1.bf16.msra.mxu0 0
    %1039 = vmatprep.subr.bf16.mxu0 0
    %1040 = vmatpush1.bf16.msra.mxu0 0
    %1041 = vmatprep.subr.bf16.mxu0 0
    %1042 = vmatpush1.bf16.msra.mxu0 0
    %1043 = vmatprep.subr.bf16.mxu0 0
    %1044 = vmatpush1.bf16.msra.mxu0 0
    %1045 = vmatprep.subr.bf16.mxu0 0
    %1046 = vmatpush1.bf16.msra.mxu0 0
    %1047 = vmatprep.subr.bf16.mxu0 0
    %1048 = vmatpush1.bf16.msra.mxu0 0
    %1049 = vmatprep.subr.bf16.mxu0 0
    %1050 = vmatpush1.bf16.msra.mxu0 0
    %1051 = vmatprep.subr.bf16.mxu0 0
    %1052 = vmatpush1.bf16.msra.mxu0 0
    %1053 = vmatprep.subr.bf16.mxu0 0
    %1054 = vmatpush1.bf16.msra.mxu0 0
    %1055 = vmatprep.subr.bf16.mxu0 0
    %1056 = vmatpush1.bf16.msra.mxu0 0
    %1057 = vmatprep.subr.bf16.mxu0 0
    %1058 = vmatpush1.bf16.msra.mxu0 0
    %1059 = vmatprep.subr.bf16.mxu0 0
    %1060 = vmatpush1.bf16.msra.mxu0 0
    %1061 = vmatprep.subr.bf16.mxu0 0
    %1062 = vmatpush1.bf16.msra.mxu0 0
    %1063 = vmatprep.mubr.bf16.mxu0 0
    %1064 = vmatmul.mubr.bf16.gmra.mrb[0].mxu0 %v1029
    %v1065 = vpop.f32.mrb[0].mxu0
    %v1066 = vadd.f32 %v1019, %v1065
    %v1067 = vpop.f32.mrb[0].mxu0
    %v1068 = vadd.f32 %v1021, %v1067
    %v1069 = vpop.f32.mrb[0].mxu0
    %v1070 = vpop.f32.mrb[0].mxu0
    %1071 = vdwg.mxu0
    %s1072 = scalar_lea.vmem [#allocation3], 112
    %v1073 = vld [vmem:[%s1072] sm:$0xff]
    %v1074 = vld [vmem:[%s1072 + $0x8] sm:$0xff]
    %v1075 = vadd.f32 %v1066, %v1073
    %v1076 = vadd.f32 %v1068, %v1074
    %v1077 = vtanh.pop %v1075
    %v1078 = vtanh.pop %v1076
    %v1079 = vmul.f32 %v1077, 0.5
    %v1080 = vmul.f32 %v1078, 0.5
    %v1081 = vadd.f32 %v1079, 0.5
    %v1082 = vadd.f32 %v1080, 0.5
    %v1083 = vmul.f32 %v1082, %v952
    %1085 = vrot.lane.b32.xlu0 %v1078, 64
    %v1086 = vpop.permute.xlu0 %1085
    %v1088 = vmul.f32 %v1082, %v1086
    %1090 = vrot.lane.b32.xlu0 %v1088, 32
    %v1091 = vpop.permute.xlu0 %1090
    %v1093 = vadd.f32 %v1083, %v1091
    %v1094 = vtanh.pop %v1093
    %1096 = vrot.lane.b32.xlu0 %v1094, 64
    %v1097 = vpop.permute.xlu0 %1096
    %v1099 = vmul.f32 %v1082, %v1097
    %v1100 = vmul.f32 %v1081, %v969
    %1102 = vrot.lane.b32.xlu0 %v1077, 64
    %v1103 = vpop.permute.xlu0 %1102
    %v1105 = vmul.f32 %v1081, %v1103
    %1107 = vrot.lane.b32.xlu0 %v1105, 32
    %v1108 = vpop.permute.xlu0 %1107
    %v1110 = vadd.f32 %v1100, %v1108
    %v1111 = vtanh.pop %v1110
    %1113 = vrot.lane.b32.xlu0 %v1111, 64
    %v1114 = vpop.permute.xlu0 %1113
    %v1116 = vmul.f32 %v1081, %v1114
    %v1117 = vpack.c.bf16 %v1116, %v1116
    %v1118 = vpack.c.bf16 %v1099, %v1099
    %1120 = vrot.lane.b32.xlu0 %v1118, 32
    %v1121 = vpop.permute.xlu0 %1120
    %v1123 = vsel %vm114, %v1121, 0
    %1125 = vmatprep.subr.bf16.mxu0 %v107
    %1126 = vmatpush1.bf16.msra.mxu0 %v106
    %1127 = vmatprep.subr.bf16.mxu0 %v109
    %1128 = vmatpush1.bf16.msra.mxu0 %v108
    %1129 = vmatprep.subr.bf16.mxu0 0
    %1130 = vmatpush1.bf16.msra.mxu0 0
    %1131 = vmatprep.subr.bf16.mxu0 0
    %1132 = vmatpush1.bf16.msra.mxu0 0
    %1133 = vmatprep.subr.bf16.mxu0 0
    %1134 = vmatpush1.bf16.msra.mxu0 0
    %1135 = vmatprep.subr.bf16.mxu0 0
    %1136 = vmatpush1.bf16.msra.mxu0 0
    %1137 = vmatprep.subr.bf16.mxu0 0
    %1138 = vmatpush1.bf16.msra.mxu0 0
    %1139 = vmatprep.subr.bf16.mxu0 0
    %1140 = vmatpush1.bf16.msra.mxu0 0
    %1141 = vmatprep.subr.bf16.mxu0 0
    %1142 = vmatpush1.bf16.msra.mxu0 0
    %1143 = vmatprep.subr.bf16.mxu0 0
    %1144 = vmatpush1.bf16.msra.mxu0 0
    %1145 = vmatprep.subr.bf16.mxu0 0
    %1146 = vmatpush1.bf16.msra.mxu0 0
    %1147 = vmatprep.subr.bf16.mxu0 0
    %1148 = vmatpush1.bf16.msra.mxu0 0
    %1149 = vmatprep.subr.bf16.mxu0 0
    %1150 = vmatpush1.bf16.msra.mxu0 0
    %1151 = vmatprep.subr.bf16.mxu0 0
    %1152 = vmatpush1.bf16.msra.mxu0 0
    %1153 = vmatprep.subr.bf16.mxu0 0
    %1154 = vmatpush1.bf16.msra.mxu0 0
    %1155 = vmatprep.subr.bf16.mxu0 0
    %1156 = vmatpush1.bf16.msra.mxu0 0
    %1157 = vmatprep.mubr.bf16.mxu0 0
    %1158 = vmatmul.mubr.bf16.gmra.mrb[0].mxu0 %v1123
    %v1159 = vpop.f32.mrb[0].mxu0
    %v1160 = vpop.f32.mrb[0].mxu0
    %v1161 = vadd.f32 0.0, %v1160
    %v1162 = vpop.f32.mrb[0].mxu0
    %v1163 = vpop.f32.mrb[0].mxu0
    %1164 = vdwg.mxu0
    %1166 = vrot.lane.b32.xlu0 %v1117, 32
    %v1167 = vpop.permute.xlu0 %1166
    %v1169 = vsel %vm114, %v1167, 0
    %1171 = vmatprep.subr.bf16.mxu0 %v175
    %1172 = vmatpush1.bf16.msra.mxu0 %v174
    %1173 = vmatprep.subr.bf16.mxu0 %v177
    %1174 = vmatpush1.bf16.msra.mxu0 %v176
    %1175 = vmatprep.subr.bf16.mxu0 0
    %1176 = vmatpush1.bf16.msra.mxu0 0
    %1177 = vmatprep.subr.bf16.mxu0 0
    %1178 = vmatpush1.bf16.msra.mxu0 0
    %1179 = vmatprep.subr.bf16.mxu0 0
    %1180 = vmatpush1.bf16.msra.mxu0 0
    %1181 = vmatprep.subr.bf16.mxu0 0
    %1182 = vmatpush1.bf16.msra.mxu0 0
    %1183 = vmatprep.subr.bf16.mxu0 0
    %1184 = vmatpush1.bf16.msra.mxu0 0
    %1185 = vmatprep.subr.bf16.mxu0 0
    %1186 = vmatpush1.bf16.msra.mxu0 0
    %1187 = vmatprep.subr.bf16.mxu0 0
    %1188 = vmatpush1.bf16.msra.mxu0 0
    %1189 = vmatprep.subr.bf16.mxu0 0
    %1190 = vmatpush1.bf16.msra.mxu0 0
    %1191 = vmatprep.subr.bf16.mxu0 0
    %1192 = vmatpush1.bf16.msra.mxu0 0
    %1193 = vmatprep.subr.bf16.mxu0 0
    %1194 = vmatpush1.bf16.msra.mxu0 0
    %1195 = vmatprep.subr.bf16.mxu0 0
    %1196 = vmatpush1.bf16.msra.mxu0 0
    %1197 = vmatprep.subr.bf16.mxu0 0
    %1198 = vmatpush1.bf16.msra.mxu0 0
    %1199 = vmatprep.subr.bf16.mxu0 0
    %1200 = vmatpush1.bf16.msra.mxu0 0
    %1201 = vmatprep.subr.bf16.mxu0 0
    %1202 = vmatpush1.bf16.msra.mxu0 0
    %1203 = vmatprep.mubr.bf16.mxu0 0
    %1204 = vmatmul.mubr.bf16.gmra.mrb[0].mxu0 %v1169
    %v1205 = vpop.f32.mrb[0].mxu0
    %v1206 = vpop.f32.mrb[0].mxu0
    %v1207 = vadd.f32 %v1161, %v1206
    %v1208 = vpop.f32.mrb[0].mxu0
    %v1209 = vpop.f32.mrb[0].mxu0
    %1210 = vdwg.mxu0
    %s1211 = scalar_lea.vmem [#allocation3], 128
    %v1212 = vld [vmem:[%s1211 + $0x8] sm:$0xff]
    %v1213 = vadd.f32 %v1207, %v1212
    %v1214 = vtanh.pop %v1213
    %v1215 = vmul.f32 %v1214, 0.5
    %v1216 = vadd.f32 %v1215, 0.5
    %v1217 = vmul.f32 %v1216, %v1093
    %1219 = vrot.lane.b32.xlu0 %v1214, 64
    %v1220 = vpop.permute.xlu0 %1219
    %v1222 = vmul.f32 %v1216, %v1220
    %1224 = vrot.lane.b32.xlu0 %v1222, 32
    %v1225 = vpop.permute.xlu0 %1224
    %v1227 = vadd.f32 %v1217, %v1225
    %v1228 = vtanh.pop %v1227
    %1230 = vrot.lane.b32.xlu0 %v1228, 64
    %v1231 = vpop.permute.xlu0 %1230
    %v1233 = vmul.f32 %v1216, %v1231
    %v1234 = vld [vmem:[%s3] sm:$0x1]
    %v1236 = vlaneseq
    %v1237 = vshrl.u32 %v1236, 7
    %v1238 = vsub.s32 0, %v1237
    %v1239 = vrot.slane %v1234, %v1238
    %1240 = vrot.lane.b32.xlu0 %v1239, 96
    %v1241 = vpop.permute.xlu0 %1240
    %v1243 = vmul.f32 %v1233, %v1241
    %1245 = vrot.lane.b32.xlu0 %v1243, 32
    %v1246 = vpop.permute.xlu0 %1245
    %v1248 = vsel %vm114, %v1246, 0.0
    %1249 = vadd.xlane.f32.xlu0 %v1248
    %v1250 = vpop.xlane.xlu0 %1249
    %v1251 = vld [vmem:[#allocation2] sm:$0x1]
    %v1253 = vlaneseq
    %v1254 = vshrl.u32 %v1253, 7
    %v1255 = vsub.s32 0, %v1254
    %v1256 = vrot.slane %v1251, %v1255
    %v1258 = vadd.f32 %v1250, %v1256
    %vm1259 = vcmask 7168
    %1260 = vst.msk [vmem:[%s5] sm:$0xff] %vm1259, %v1258
    // Predicated region
    $region34: #{tpu_custom_call.1} parent=1 // pred_check
      _
    $region35: #{tpu_custom_call.1} parent=1 // pred_check_branch
      %1262 = sbr.rel (0) target = $region37
    $region36: #{tpu_custom_call.1} parent=1 // pred_region
      _
    $region37: #{tpu_custom_call.1} parent=1 // pred_fallthru
      _
    // Predicated region
    $region38: #{tpu_custom_call.1} parent=1 // pred_check
      _
    $region39: #{tpu_custom_call.1} parent=1 // pred_check_branch
      %1264 = sbr.rel (0) target = $region41
    $region40: #{tpu_custom_call.1} parent=1 // pred_region
      _
    $region41: #{tpu_custom_call.1} parent=1 // pred_fallthru
      _
    %1265 = vsyncpa [#allocation4], 1
    %1266 = vsyncpa [#allocation6], 1

</llo_original>
